<compile_context>
chip_gen: v5e
topology: v5e:2x2
jax: 0.10.0
libtpu: 0.0.40
codegen_flags: <defaults>
</compile_context>

<pallas_src>
import functools

import jax
import jax.numpy as jnp
import numpy as np
from jax.experimental import pallas as pl
from jax.experimental.pallas import tpu as pltpu


# ---------------------------------------------------------------------------
# Pallas kernel: one batch tile x one chunk of `time_block` LSTM steps per
# grid iteration.  Only the recurrent matmul (h @ W_hh^T) is computed here;
# the input projection + bias arrive precomputed as `pre_gates`.
# ---------------------------------------------------------------------------
def _lstm_chunk_kernel(pg_ref, whh_hbm, len_ref, out_ref,
                       whh_vmem, h_scr, c_scr, *, time_block, hidden_pad):
    Hp = hidden_pad

    # At the first time chunk of every batch tile: reset state and fetch the
    # (constant, resident, single-buffered) recurrent weights into VMEM.
    @pl.when(pl.program_id(1) == 0)
    def _():
        pltpu.sync_copy(whh_hbm, whh_vmem)        # one DMA per batch tile
        h_scr[...] = jnp.zeros_like(h_scr)
        c_scr[...] = jnp.zeros_like(c_scr)

    t_base = pl.program_id(1) * time_block
    lens = len_ref[...]                           # (B_TILE, 1) int32

    h = h_scr[...]                                # (B_TILE, Hp) f32
    c = c_scr[...]                                # (B_TILE, Hp) f32

    # time_block is small & static: full unroll with compile-time-constant,
    # lane-aligned slices (gate blocks start on 128-lane boundaries).
    for s in range(time_block):
        # Recurrent matmul on the MXU (bf16 inputs in production, f32 acc).
        gates = pg_ref[s].astype(jnp.float32) + jnp.dot(
            h.astype(whh_vmem.dtype), whh_vmem[...],
            preferred_element_type=jnp.float32)

        # Gate order [i, f, g, o]; sigmoid(x) = 0.5*tanh(0.5*x)+0.5 -> 1 EUP op.
        i_g = 0.5 * jnp.tanh(0.5 * gates[:, 0 * Hp:1 * Hp]) + 0.5
        f_g = 0.5 * jnp.tanh(0.5 * gates[:, 1 * Hp:2 * Hp]) + 0.5
        g_g = jnp.tanh(gates[:, 2 * Hp:3 * Hp])
        o_g = 0.5 * jnp.tanh(0.5 * gates[:, 3 * Hp:4 * Hp]) + 0.5

        c_new = f_g * c + i_g * g_g
        h_new = o_g * jnp.tanh(c_new)

        # valid[b] = t < lengths[b]; freeze state, emit zeros on padded steps.
        valid = (t_base + s) < lens               # (B_TILE, 1) bool
        h = jnp.where(valid, h_new, h)
        c = jnp.where(valid, c_new, c)
        out_ref[s] = jnp.where(valid, h_new, 0.0).astype(out_ref.dtype)

    h_scr[...] = h
    c_scr[...] = c


# ---------------------------------------------------------------------------
# Wrapper: layout padding, hoisted input GEMM, pallas_call.
# ---------------------------------------------------------------------------
def lstm_encoder_forward(cur_inputs, current_frame, params, hidden_size, *,
                         time_block=16, batch_block=8,
                         matmul_dtype=jnp.bfloat16, pre_dtype=jnp.bfloat16):
    """cur_inputs: (T, B, F) float32; current_frame: lengths (descending).
    Returns (T_max, B, H) float32, T_max = max(lengths)."""
    T, B, F = cur_inputs.shape
    H = hidden_size
    lengths = np.asarray(current_frame)
    t_max = int(lengths.max())

    LANE, SUB = 128, 8
    Hp = ((H + LANE - 1) // LANE) * LANE                 # lane-aligned hidden
    B_TILE = max(SUB, ((batch_block + SUB - 1) // SUB) * SUB)
    Bp = ((B + B_TILE - 1) // B_TILE) * B_TILE           # batch padded to tile
    n_btiles = Bp // B_TILE

    pre_bytes = jnp.dtype(pre_dtype).itemsize
    w_bytes = jnp.dtype(matmul_dtype).itemsize

    # --- pick TB against a v7x-safe VMEM budget (64 MiB physical there) -----
    VMEM_BUDGET = 40 * (1 << 20)

    def _est_vmem(tb):
        pre_blk = 2 * tb * B_TILE * 4 * Hp * pre_bytes   # double-buffered stream
        out_blk = 2 * tb * B_TILE * Hp * 4               # double-buffered output
        whh_blk = Hp * 4 * Hp * w_bytes                  # single-buffered weights
        state = 2 * B_TILE * Hp * 4                      # h / c scratch
        return pre_blk + out_blk + whh_blk + state + (1 << 20)

    TB = max(1, min(time_block, t_max))
    while TB > 1 and _est_vmem(TB) > VMEM_BUDGET:
        TB //= 2
    Tp = ((t_max + TB - 1) // TB) * TB
    vmem_limit = int(min(64 * (1 << 20), max(32 * (1 << 20), 2 * _est_vmem(TB))))

    # --- pad weights so each gate block starts on a 128-lane boundary -------
    def pad_gate_cols(w):                                # (..., 4H) -> (..., 4*Hp)
        lead = w.shape[:-1]
        w4 = w.reshape(lead + (4, H))
        w4 = jnp.pad(w4, [(0, 0)] * len(lead) + [(0, 0), (0, Hp - H)])
        return w4.reshape(lead + (4 * Hp,))

    w_ih_tp = pad_gate_cols(jnp.transpose(params["w_ih"]))      # (F, 4Hp) f32
    w_hh_tp = pad_gate_cols(jnp.transpose(params["w_hh"]))      # (H, 4Hp)
    w_hh_tp = jnp.pad(w_hh_tp, ((0, Hp - H), (0, 0)))           # (Hp, 4Hp)
    w_hh_tp = w_hh_tp.astype(matmul_dtype)
    bias_p = pad_gate_cols(params["b_ih"] + params["b_hh"])     # (4Hp,)

    # --- pad x (F-wide) BEFORE the hoisted input GEMM ------------------------
    x = cur_inputs[:t_max]                                       # (T_max, B, F)
    x = jnp.pad(x, ((0, Tp - t_max), (0, Bp - B), (0, 0)))       # (Tp, Bp, F)
    pre = jnp.dot(x.reshape(Tp * Bp, F), w_ih_tp,
                  preferred_element_type=jnp.float32) + bias_p
    pre = pre.astype(pre_dtype).reshape(Tp, Bp, 4 * Hp)          # (Tp, Bp, 4Hp)

    lens_p = np.zeros((Bp, 1), np.int32)
    lens_p[:B, 0] = lengths                                      # padded rows -> 0
    lens_p = jnp.asarray(lens_p)

    kernel = functools.partial(_lstm_chunk_kernel, time_block=TB, hidden_pad=Hp)

    out = pl.pallas_call(
        kernel,
        out_shape=jax.ShapeDtypeStruct((Tp, Bp, Hp), jnp.float32),
        grid_spec=pltpu.PrefetchScalarGridSpec(
            num_scalar_prefetch=0,
            grid=(n_btiles, Tp // TB),
            in_specs=[
                # pre-gates chunk for this (batch tile, time chunk)
                pl.BlockSpec((TB, B_TILE, 4 * Hp), lambda b, t: (t, b, 0)),
                # W_hh^T stays in HBM; copied once per batch tile in-kernel
                pl.BlockSpec(memory_space=pl.ANY),
                # lengths for this batch tile
                pl.BlockSpec((B_TILE, 1), lambda b, t: (b, 0)),
            ],
            out_specs=pl.BlockSpec((TB, B_TILE, Hp), lambda b, t: (t, b, 0)),
            scratch_shapes=[
                pltpu.VMEM((Hp, 4 * Hp), matmul_dtype),   # resident W_hh^T
                pltpu.VMEM((B_TILE, Hp), jnp.float32),    # h state
                pltpu.VMEM((B_TILE, Hp), jnp.float32),    # c state
            ],
        ),
        compiler_params=pltpu.CompilerParams(
            dimension_semantics=("parallel", "arbitrary"),  # batch || , time seq
            vmem_limit_bytes=vmem_limit,
        ),
    )(pre, w_hh_tp, lens_p)

    return out[:t_max, :B, :H]


# ---------------------------------------------------------------------------
# Pure-JAX reference (packed-sequence LSTM semantics).
# ---------------------------------------------------------------------------
def lstm_encoder_reference(cur_inputs, current_frame, params, hidden_size):
    H = hidden_size
    t_max = int(max(current_frame))
    x = cur_inputs[:t_max]
    T, B, F = x.shape
    lengths = jnp.asarray(np.asarray(current_frame), jnp.int32)
    w_ih, w_hh = params["w_ih"], params["w_hh"]
    b = params["b_ih"] + params["b_hh"]

    def step(carry, inp):
        h, c = carry
        x_t, t = inp
        gates = x_t @ w_ih.T + h @ w_hh.T + b
        i = jax.nn.sigmoid(gates[:, 0 * H:1 * H])
        f = jax.nn.sigmoid(gates[:, 1 * H:2 * H])
        g = jnp.tanh(gates[:, 2 * H:3 * H])
        o = jax.nn.sigmoid(gates[:, 3 * H:4 * H])
        c_new = f * c + i * g
        h_new = o * jnp.tanh(c_new)
        valid = (t < lengths)[:, None]
        h = jnp.where(valid, h_new, h)
        c = jnp.where(valid, c_new, c)
        out = jnp.where(valid, h_new, 0.0)
        return (h, c), out

    init = (jnp.zeros((B, H), jnp.float32), jnp.zeros((B, H), jnp.float32))
    _, outs = jax.lax.scan(step, init, (x, jnp.arange(T)))
    return outs


# ---------------------------------------------------------------------------
# Deterministic parameter init (PyTorch LSTM shapes: 4H x F, 4H x H, 4H, 4H).
# ---------------------------------------------------------------------------
def init_lstm_params(key, feature_dim, hidden_size):
    k = 1.0 / np.sqrt(hidden_size)
    k1, k2, k3, k4 = jax.random.split(key, 4)
    return {
        "w_ih": jax.random.uniform(k1, (4 * hidden_size, feature_dim), jnp.float32, -k, k),
        "w_hh": jax.random.uniform(k2, (4 * hidden_size, hidden_size), jnp.float32, -k, k),
        "b_ih": jax.random.uniform(k3, (4 * hidden_size,), jnp.float32, -k, k),
        "b_hh": jax.random.uniform(k4, (4 * hidden_size,), jnp.float32, -k, k),
    }


if __name__ == "__main__":
    FEATURE_DIM = 16
    HIDDEN_SIZE = 32
    SEQ_LEN = 8
    BATCH = 10     # -> 2 batch tiles of 8: exercises the "parallel" batch axis

    key = jax.random.PRNGKey(0)
    k_x, k_p = jax.random.split(key)

    # Time-major inputs (T, B, F); lengths sorted descending.
    cur_inputs = jax.random.normal(k_x, (SEQ_LEN, BATCH, FEATURE_DIM), jnp.float32)
    current_frame = [8, 8, 7, 6, 6, 5, 4, 3, 2, 2]

    params = init_lstm_params(k_p, FEATURE_DIM, HIDDEN_SIZE)
    ref = lstm_encoder_reference(cur_inputs, current_frame, params, HIDDEN_SIZE)

    # 1) Exactness check: f32 path, small time chunks (exercises multi-chunk
    #    state carry + per-batch-tile reset + per-tile W_hh fetch).
    out_f32 = lstm_encoder_forward(
        cur_inputs, current_frame, params, HIDDEN_SIZE,
        time_block=4, matmul_dtype=jnp.float32, pre_dtype=jnp.float32)
    out_f32 = jax.block_until_ready(out_f32)
    np.testing.assert_allclose(np.asarray(out_f32), np.asarray(ref),
                               rtol=1e-4, atol=1e-4)

    # 2) Production path: bf16 recurrent weights + bf16 pre-gates stream
    #    (f32 accumulation / state).  Expected small drift vs f32 reference.
    out_bf16 = lstm_encoder_forward(cur_inputs, current_frame, params, HIDDEN_SIZE)
    out_bf16 = jax.block_until_ready(out_bf16)
    np.testing.assert_allclose(np.asarray(out_bf16), np.asarray(ref),
                               rtol=5e-2, atol=5e-2)

    print("KERNEL_OK")
</pallas_src>

<mosaic_0001>
module attributes {stable_mosaic.version = 11 : i64} {
  func.func @_lstm_chunk_kernel(%arg0: i32, %arg1: i32, %arg2: memref<4x8x512xf32, #tpu.memory_space<vmem>>, %arg3: memref<128x512xf32, #tpu.memory_space<any>>, %arg4: memref<8x1xi32, #tpu.memory_space<vmem>>, %arg5: memref<4x8x128xf32, #tpu.memory_space<vmem>>, %arg6: memref<128x512xf32, #tpu.memory_space<vmem>>, %arg7: memref<8x128xf32, #tpu.memory_space<vmem>>, %arg8: memref<8x128xf32, #tpu.memory_space<vmem>>) attributes {dimension_semantics = [#tpu.dimension_semantics<parallel>, #tpu.dimension_semantics<arbitrary>], iteration_bounds = array<i64: 2, 2>, scalar_prefetch = 0 : i64, scratch_operands = 3 : i64, tpu.core_type = #tpu.core_type<tc>, window_params = [{transform_indices = @transform_0, window_bounds = array<i64: 4, 8, 512>}, {}, {transform_indices = @transform_2, window_bounds = array<i64: 8, 1>}, {transform_indices = @transform_3, window_bounds = array<i64: 4, 8, 128>}]} {
    %c0_i32 = arith.constant 0 : i32
    %0 = arith.cmpi eq, %arg1, %c0_i32 : i32
    %1 = arith.extui %0 : i1 to i32
    %c0_i32_0 = arith.constant 0 : i32
    %2 = arith.cmpi ne, %1, %c0_i32_0 : i32
    scf.if %2 {
      "tpu.region"() ({
        %221 = tpu.sem_alloc : memref<!tpu.dma_semaphore, #tpu.memory_space<semaphore_mem>>
        tpu.enqueue_dma source(%arg3 : memref<128x512xf32, #tpu.memory_space<any>>) target(%arg6 : memref<128x512xf32, #tpu.memory_space<vmem>>) target_semaphore(%221 : memref<!tpu.dma_semaphore, #tpu.memory_space<semaphore_mem>>)
        tpu.wait_dma2 semaphore(%221 : memref<!tpu.dma_semaphore, #tpu.memory_space<semaphore_mem>>) src(%arg3 : memref<128x512xf32, #tpu.memory_space<any>>) dst(%arg6 : memref<128x512xf32, #tpu.memory_space<vmem>>)
        tpu.yield
      }) : () -> ()
      %cst_83 = arith.constant 0.000000e+00 : f32
      %217 = vector.broadcast %cst_83 : f32 to vector<8x128xf32>
      %c0_84 = arith.constant 0 : index
      %c0_85 = arith.constant 0 : index
      %218 = vector.load %arg7[%c0_84, %c0_85] : memref<8x128xf32, #tpu.memory_space<vmem>>, vector<8x128xf32>
      tpu.vector_store %arg7[%c0_84, %c0_85], %217 {strides = array<i32>} : memref<8x128xf32, #tpu.memory_space<vmem>>, vector<8x128xf32>,
      %cst_86 = arith.constant 0.000000e+00 : f32
      %219 = vector.broadcast %cst_86 : f32 to vector<8x128xf32>
      %c0_87 = arith.constant 0 : index
      %c0_88 = arith.constant 0 : index
      %220 = vector.load %arg8[%c0_87, %c0_88] : memref<8x128xf32, #tpu.memory_space<vmem>>, vector<8x128xf32>
      tpu.vector_store %arg8[%c0_87, %c0_88], %219 {strides = array<i32>} : memref<8x128xf32, #tpu.memory_space<vmem>>, vector<8x128xf32>,
    } else {
    }
    %c4_i32 = arith.constant 4 : i32
    %3 = arith.muli %arg1, %c4_i32 : i32
    %c0 = arith.constant 0 : index
    %c0_1 = arith.constant 0 : index
    %4 = vector.load %arg4[%c0, %c0_1] : memref<8x1xi32, #tpu.memory_space<vmem>>, vector<8x1xi32>
    %c0_2 = arith.constant 0 : index
    %c0_3 = arith.constant 0 : index
    %5 = vector.load %arg7[%c0_2, %c0_3] : memref<8x128xf32, #tpu.memory_space<vmem>>, vector<8x128xf32>
    %c0_4 = arith.constant 0 : index
    %c0_5 = arith.constant 0 : index
    %6 = vector.load %arg8[%c0_4, %c0_5] : memref<8x128xf32, #tpu.memory_space<vmem>>, vector<8x128xf32>
    %c0_6 = arith.constant 0 : index
    %c0_7 = arith.constant 0 : index
    %c0_8 = arith.constant 0 : index
    %7 = vector.load %arg2[%c0_6, %c0_7, %c0_8] : memref<4x8x512xf32, #tpu.memory_space<vmem>>, vector<1x8x512xf32>
    %8 = vector.shape_cast %7 : vector<1x8x512xf32> to vector<8x512xf32>
    %c0_9 = arith.constant 0 : index
    %c0_10 = arith.constant 0 : index
    %9 = vector.load %arg6[%c0_9, %c0_10] : memref<128x512xf32, #tpu.memory_space<vmem>>, vector<128x512xf32>
    %cst = arith.constant dense<0.000000e+00> : vector<8x512xf32>
    %10 = tpu.matmul %5, %9, %cst {dimension_numbers = #tpu.dot_dimension_numbers<[1], [0], [0], [1], [0, 0, 1, 1], [], []>} : vector<8x128xf32>, vector<128x512xf32>, vector<8x512xf32> -> vector<8x512xf32>
    %11 = arith.addf %8, %10 : vector<8x512xf32>
    %12 = vector.extract_strided_slice %11 {offsets = [0, 0], sizes = [8, 128], strides = [1, 1]} : vector<8x512xf32> to vector<8x128xf32>
    %cst_11 = arith.constant 5.000000e-01 : f32
    %13 = vector.broadcast %cst_11 : f32 to vector<8x128xf32>
    %14 = arith.mulf %13, %12 : vector<8x128xf32>
    %15 = math.tanh %14 : vector<8x128xf32>
    %cst_12 = arith.constant 5.000000e-01 : f32
    %16 = vector.broadcast %cst_12 : f32 to vector<8x128xf32>
    %17 = arith.mulf %16, %15 : vector<8x128xf32>
    %cst_13 = arith.constant 5.000000e-01 : f32
    %18 = vector.broadcast %cst_13 : f32 to vector<8x128xf32>
    %19 = arith.addf %17, %18 : vector<8x128xf32>
    %20 = vector.extract_strided_slice %11 {offsets = [0, 128], sizes = [8, 128], strides = [1, 1]} : vector<8x512xf32> to vector<8x128xf32>
    %cst_14 = arith.constant 5.000000e-01 : f32
    %21 = vector.broadcast %cst_14 : f32 to vector<8x128xf32>
    %22 = arith.mulf %21, %20 : vector<8x128xf32>
    %23 = math.tanh %22 : vector<8x128xf32>
    %cst_15 = arith.constant 5.000000e-01 : f32
    %24 = vector.broadcast %cst_15 : f32 to vector<8x128xf32>
    %25 = arith.mulf %24, %23 : vector<8x128xf32>
    %cst_16 = arith.constant 5.000000e-01 : f32
    %26 = vector.broadcast %cst_16 : f32 to vector<8x128xf32>
    %27 = arith.addf %25, %26 : vector<8x128xf32>
    %28 = vector.extract_strided_slice %11 {offsets = [0, 256], sizes = [8, 128], strides = [1, 1]} : vector<8x512xf32> to vector<8x128xf32>
    %29 = math.tanh %28 : vector<8x128xf32>
    %30 = vector.extract_strided_slice %11 {offsets = [0, 384], sizes = [8, 128], strides = [1, 1]} : vector<8x512xf32> to vector<8x128xf32>
    %cst_17 = arith.constant 5.000000e-01 : f32
    %31 = vector.broadcast %cst_17 : f32 to vector<8x128xf32>
    %32 = arith.mulf %31, %30 : vector<8x128xf32>
    %33 = math.tanh %32 : vector<8x128xf32>
    %cst_18 = arith.constant 5.000000e-01 : f32
    %34 = vector.broadcast %cst_18 : f32 to vector<8x128xf32>
    %35 = arith.mulf %34, %33 : vector<8x128xf32>
    %cst_19 = arith.constant 5.000000e-01 : f32
    %36 = vector.broadcast %cst_19 : f32 to vector<8x128xf32>
    %37 = arith.addf %35, %36 : vector<8x128xf32>
    %38 = arith.mulf %27, %6 : vector<8x128xf32>
    %39 = arith.mulf %19, %29 : vector<8x128xf32>
    %40 = arith.addf %38, %39 : vector<8x128xf32>
    %41 = math.tanh %40 : vector<8x128xf32>
    %42 = arith.mulf %37, %41 : vector<8x128xf32>
    %c0_i32_20 = arith.constant 0 : i32
    %43 = arith.addi %3, %c0_i32_20 : i32
    %44 = vector.broadcast %43 : i32 to vector<8x1xi32>
    %45 = arith.cmpi slt, %44, %4 : vector<8x1xi32>
    %46 = vector.shape_cast %45 : vector<8x1xi1> to vector<8x1xi1>
    %47 = vector.broadcast %46 : vector<8x1xi1> to vector<8x128xi1>
    %48 = arith.select %47, %42, %5 : vector<8x128xi1>, vector<8x128xf32>
    %49 = vector.shape_cast %45 : vector<8x1xi1> to vector<8x1xi1>
    %50 = vector.broadcast %49 : vector<8x1xi1> to vector<8x128xi1>
    %51 = arith.select %50, %40, %6 : vector<8x128xi1>, vector<8x128xf32>
    %cst_21 = arith.constant 0.000000e+00 : f32
    %52 = vector.shape_cast %45 : vector<8x1xi1> to vector<8x1xi1>
    %53 = vector.broadcast %52 : vector<8x1xi1> to vector<8x128xi1>
    %54 = vector.broadcast %cst_21 : f32 to vector<8x128xf32>
    %55 = arith.select %53, %42, %54 : vector<8x128xi1>, vector<8x128xf32>
    %c0_22 = arith.constant 0 : index
    %c0_23 = arith.constant 0 : index
    %c0_24 = arith.constant 0 : index
    %56 = vector.load %arg5[%c0_22, %c0_23, %c0_24] : memref<4x8x128xf32, #tpu.memory_space<vmem>>, vector<1x8x128xf32>
    %57 = vector.shape_cast %56 : vector<1x8x128xf32> to vector<8x128xf32>
    %58 = vector.shape_cast %55 : vector<8x128xf32> to vector<1x8x128xf32>
    tpu.vector_store %arg5[%c0_22, %c0_23, %c0_24], %58 {strides = array<i32>} : memref<4x8x128xf32, #tpu.memory_space<vmem>>, vector<1x8x128xf32>,
    %c1 = arith.constant 1 : index
    %c0_25 = arith.constant 0 : index
    %c0_26 = arith.constant 0 : index
    %59 = vector.load %arg2[%c1, %c0_25, %c0_26] : memref<4x8x512xf32, #tpu.memory_space<vmem>>, vector<1x8x512xf32>
    %60 = vector.shape_cast %59 : vector<1x8x512xf32> to vector<8x512xf32>
    %c0_27 = arith.constant 0 : index
    %c0_28 = arith.constant 0 : index
    %61 = vector.load %arg6[%c0_27, %c0_28] : memref<128x512xf32, #tpu.memory_space<vmem>>, vector<128x512xf32>
    %cst_29 = arith.constant dense<0.000000e+00> : vector<8x512xf32>
    %62 = tpu.matmul %48, %61, %cst_29 {dimension_numbers = #tpu.dot_dimension_numbers<[1], [0], [0], [1], [0, 0, 1, 1], [], []>} : vector<8x128xf32>, vector<128x512xf32>, vector<8x512xf32> -> vector<8x512xf32>
    %63 = arith.addf %60, %62 : vector<8x512xf32>
    %64 = vector.extract_strided_slice %63 {offsets = [0, 0], sizes = [8, 128], strides = [1, 1]} : vector<8x512xf32> to vector<8x128xf32>
    %cst_30 = arith.constant 5.000000e-01 : f32
    %65 = vector.broadcast %cst_30 : f32 to vector<8x128xf32>
    %66 = arith.mulf %65, %64 : vector<8x128xf32>
    %67 = math.tanh %66 : vector<8x128xf32>
    %cst_31 = arith.constant 5.000000e-01 : f32
    %68 = vector.broadcast %cst_31 : f32 to vector<8x128xf32>
    %69 = arith.mulf %68, %67 : vector<8x128xf32>
    %cst_32 = arith.constant 5.000000e-01 : f32
    %70 = vector.broadcast %cst_32 : f32 to vector<8x128xf32>
    %71 = arith.addf %69, %70 : vector<8x128xf32>
    %72 = vector.extract_strided_slice %63 {offsets = [0, 128], sizes = [8, 128], strides = [1, 1]} : vector<8x512xf32> to vector<8x128xf32>
    %cst_33 = arith.constant 5.000000e-01 : f32
    %73 = vector.broadcast %cst_33 : f32 to vector<8x128xf32>
    %74 = arith.mulf %73, %72 : vector<8x128xf32>
    %75 = math.tanh %74 : vector<8x128xf32>
    %cst_34 = arith.constant 5.000000e-01 : f32
    %76 = vector.broadcast %cst_34 : f32 to vector<8x128xf32>
    %77 = arith.mulf %76, %75 : vector<8x128xf32>
    %cst_35 = arith.constant 5.000000e-01 : f32
    %78 = vector.broadcast %cst_35 : f32 to vector<8x128xf32>
    %79 = arith.addf %77, %78 : vector<8x128xf32>
    %80 = vector.extract_strided_slice %63 {offsets = [0, 256], sizes = [8, 128], strides = [1, 1]} : vector<8x512xf32> to vector<8x128xf32>
    %81 = math.tanh %80 : vector<8x128xf32>
    %82 = vector.extract_strided_slice %63 {offsets = [0, 384], sizes = [8, 128], strides = [1, 1]} : vector<8x512xf32> to vector<8x128xf32>
    %cst_36 = arith.constant 5.000000e-01 : f32
    %83 = vector.broadcast %cst_36 : f32 to vector<8x128xf32>
    %84 = arith.mulf %83, %82 : vector<8x128xf32>
    %85 = math.tanh %84 : vector<8x128xf32>
    %cst_37 = arith.constant 5.000000e-01 : f32
    %86 = vector.broadcast %cst_37 : f32 to vector<8x128xf32>
    %87 = arith.mulf %86, %85 : vector<8x128xf32>
    %cst_38 = arith.constant 5.000000e-01 : f32
    %88 = vector.broadcast %cst_38 : f32 to vector<8x128xf32>
    %89 = arith.addf %87, %88 : vector<8x128xf32>
    %90 = arith.mulf %79, %51 : vector<8x128xf32>
    %91 = arith.mulf %71, %81 : vector<8x128xf32>
    %92 = arith.addf %90, %91 : vector<8x128xf32>
    %93 = math.tanh %92 : vector<8x128xf32>
    %94 = arith.mulf %89, %93 : vector<8x128xf32>
    %c1_i32 = arith.constant 1 : i32
    %95 = arith.addi %3, %c1_i32 : i32
    %96 = vector.broadcast %95 : i32 to vector<8x1xi32>
    %97 = arith.cmpi slt, %96, %4 : vector<8x1xi32>
    %98 = vector.shape_cast %97 : vector<8x1xi1> to vector<8x1xi1>
    %99 = vector.broadcast %98 : vector<8x1xi1> to vector<8x128xi1>
    %100 = arith.select %99, %94, %48 : vector<8x128xi1>, vector<8x128xf32>
    %101 = vector.shape_cast %97 : vector<8x1xi1> to vector<8x1xi1>
    %102 = vector.broadcast %101 : vector<8x1xi1> to vector<8x128xi1>
    %103 = arith.select %102, %92, %51 : vector<8x128xi1>, vector<8x128xf32>
    %cst_39 = arith.constant 0.000000e+00 : f32
    %104 = vector.shape_cast %97 : vector<8x1xi1> to vector<8x1xi1>
    %105 = vector.broadcast %104 : vector<8x1xi1> to vector<8x128xi1>
    %106 = vector.broadcast %cst_39 : f32 to vector<8x128xf32>
    %107 = arith.select %105, %94, %106 : vector<8x128xi1>, vector<8x128xf32>
    %c1_40 = arith.constant 1 : index
    %c0_41 = arith.constant 0 : index
    %c0_42 = arith.constant 0 : index
    %108 = vector.load %arg5[%c1_40, %c0_41, %c0_42] : memref<4x8x128xf32, #tpu.memory_space<vmem>>, vector<1x8x128xf32>
    %109 = vector.shape_cast %108 : vector<1x8x128xf32> to vector<8x128xf32>
    %110 = vector.shape_cast %107 : vector<8x128xf32> to vector<1x8x128xf32>
    tpu.vector_store %arg5[%c1_40, %c0_41, %c0_42], %110 {strides = array<i32>} : memref<4x8x128xf32, #tpu.memory_space<vmem>>, vector<1x8x128xf32>,
    %c2 = arith.constant 2 : index
    %c0_43 = arith.constant 0 : index
    %c0_44 = arith.constant 0 : index
    %111 = vector.load %arg2[%c2, %c0_43, %c0_44] : memref<4x8x512xf32, #tpu.memory_space<vmem>>, vector<1x8x512xf32>
    %112 = vector.shape_cast %111 : vector<1x8x512xf32> to vector<8x512xf32>
    %c0_45 = arith.constant 0 : index
    %c0_46 = arith.constant 0 : index
    %113 = vector.load %arg6[%c0_45, %c0_46] : memref<128x512xf32, #tpu.memory_space<vmem>>, vector<128x512xf32>
    %cst_47 = arith.constant dense<0.000000e+00> : vector<8x512xf32>
    %114 = tpu.matmul %100, %113, %cst_47 {dimension_numbers = #tpu.dot_dimension_numbers<[1], [0], [0], [1], [0, 0, 1, 1], [], []>} : vector<8x128xf32>, vector<128x512xf32>, vector<8x512xf32> -> vector<8x512xf32>
    %115 = arith.addf %112, %114 : vector<8x512xf32>
    %116 = vector.extract_strided_slice %115 {offsets = [0, 0], sizes = [8, 128], strides = [1, 1]} : vector<8x512xf32> to vector<8x128xf32>
    %cst_48 = arith.constant 5.000000e-01 : f32
    %117 = vector.broadcast %cst_48 : f32 to vector<8x128xf32>
    %118 = arith.mulf %117, %116 : vector<8x128xf32>
    %119 = math.tanh %118 : vector<8x128xf32>
    %cst_49 = arith.constant 5.000000e-01 : f32
    %120 = vector.broadcast %cst_49 : f32 to vector<8x128xf32>
    %121 = arith.mulf %120, %119 : vector<8x128xf32>
    %cst_50 = arith.constant 5.000000e-01 : f32
    %122 = vector.broadcast %cst_50 : f32 to vector<8x128xf32>
    %123 = arith.addf %121, %122 : vector<8x128xf32>
    %124 = vector.extract_strided_slice %115 {offsets = [0, 128], sizes = [8, 128], strides = [1, 1]} : vector<8x512xf32> to vector<8x128xf32>
    %cst_51 = arith.constant 5.000000e-01 : f32
    %125 = vector.broadcast %cst_51 : f32 to vector<8x128xf32>
    %126 = arith.mulf %125, %124 : vector<8x128xf32>
    %127 = math.tanh %126 : vector<8x128xf32>
    %cst_52 = arith.constant 5.000000e-01 : f32
    %128 = vector.broadcast %cst_52 : f32 to vector<8x128xf32>
    %129 = arith.mulf %128, %127 : vector<8x128xf32>
    %cst_53 = arith.constant 5.000000e-01 : f32
    %130 = vector.broadcast %cst_53 : f32 to vector<8x128xf32>
    %131 = arith.addf %129, %130 : vector<8x128xf32>
    %132 = vector.extract_strided_slice %115 {offsets = [0, 256], sizes = [8, 128], strides = [1, 1]} : vector<8x512xf32> to vector<8x128xf32>
    %133 = math.tanh %132 : vector<8x128xf32>
    %134 = vector.extract_strided_slice %115 {offsets = [0, 384], sizes = [8, 128], strides = [1, 1]} : vector<8x512xf32> to vector<8x128xf32>
    %cst_54 = arith.constant 5.000000e-01 : f32
    %135 = vector.broadcast %cst_54 : f32 to vector<8x128xf32>
    %136 = arith.mulf %135, %134 : vector<8x128xf32>
    %137 = math.tanh %136 : vector<8x128xf32>
    %cst_55 = arith.constant 5.000000e-01 : f32
    %138 = vector.broadcast %cst_55 : f32 to vector<8x128xf32>
    %139 = arith.mulf %138, %137 : vector<8x128xf32>
    %cst_56 = arith.constant 5.000000e-01 : f32
    %140 = vector.broadcast %cst_56 : f32 to vector<8x128xf32>
    %141 = arith.addf %139, %140 : vector<8x128xf32>
    %142 = arith.mulf %131, %103 : vector<8x128xf32>
    %143 = arith.mulf %123, %133 : vector<8x128xf32>
    %144 = arith.addf %142, %143 : vector<8x128xf32>
    %145 = math.tanh %144 : vector<8x128xf32>
    %146 = arith.mulf %141, %145 : vector<8x128xf32>
    %c2_i32 = arith.constant 2 : i32
    %147 = arith.addi %3, %c2_i32 : i32
    %148 = vector.broadcast %147 : i32 to vector<8x1xi32>
    %149 = arith.cmpi slt, %148, %4 : vector<8x1xi32>
    %150 = vector.shape_cast %149 : vector<8x1xi1> to vector<8x1xi1>
    %151 = vector.broadcast %150 : vector<8x1xi1> to vector<8x128xi1>
    %152 = arith.select %151, %146, %100 : vector<8x128xi1>, vector<8x128xf32>
    %153 = vector.shape_cast %149 : vector<8x1xi1> to vector<8x1xi1>
    %154 = vector.broadcast %153 : vector<8x1xi1> to vector<8x128xi1>
    %155 = arith.select %154, %144, %103 : vector<8x128xi1>, vector<8x128xf32>
    %cst_57 = arith.constant 0.000000e+00 : f32
    %156 = vector.shape_cast %149 : vector<8x1xi1> to vector<8x1xi1>
    %157 = vector.broadcast %156 : vector<8x1xi1> to vector<8x128xi1>
    %158 = vector.broadcast %cst_57 : f32 to vector<8x128xf32>
    %159 = arith.select %157, %146, %158 : vector<8x128xi1>, vector<8x128xf32>
    %c2_58 = arith.constant 2 : index
    %c0_59 = arith.constant 0 : index
    %c0_60 = arith.constant 0 : index
    %160 = vector.load %arg5[%c2_58, %c0_59, %c0_60] : memref<4x8x128xf32, #tpu.memory_space<vmem>>, vector<1x8x128xf32>
    %161 = vector.shape_cast %160 : vector<1x8x128xf32> to vector<8x128xf32>
    %162 = vector.shape_cast %159 : vector<8x128xf32> to vector<1x8x128xf32>
    tpu.vector_store %arg5[%c2_58, %c0_59, %c0_60], %162 {strides = array<i32>} : memref<4x8x128xf32, #tpu.memory_space<vmem>>, vector<1x8x128xf32>,
    %c3 = arith.constant 3 : index
    %c0_61 = arith.constant 0 : index
    %c0_62 = arith.constant 0 : index
    %163 = vector.load %arg2[%c3, %c0_61, %c0_62] : memref<4x8x512xf32, #tpu.memory_space<vmem>>, vector<1x8x512xf32>
    %164 = vector.shape_cast %163 : vector<1x8x512xf32> to vector<8x512xf32>
    %c0_63 = arith.constant 0 : index
    %c0_64 = arith.constant 0 : index
    %165 = vector.load %arg6[%c0_63, %c0_64] : memref<128x512xf32, #tpu.memory_space<vmem>>, vector<128x512xf32>
    %cst_65 = arith.constant dense<0.000000e+00> : vector<8x512xf32>
    %166 = tpu.matmul %152, %165, %cst_65 {dimension_numbers = #tpu.dot_dimension_numbers<[1], [0], [0], [1], [0, 0, 1, 1], [], []>} : vector<8x128xf32>, vector<128x512xf32>, vector<8x512xf32> -> vector<8x512xf32>
    %167 = arith.addf %164, %166 : vector<8x512xf32>
    %168 = vector.extract_strided_slice %167 {offsets = [0, 0], sizes = [8, 128], strides = [1, 1]} : vector<8x512xf32> to vector<8x128xf32>
    %cst_66 = arith.constant 5.000000e-01 : f32
    %169 = vector.broadcast %cst_66 : f32 to vector<8x128xf32>
    %170 = arith.mulf %169, %168 : vector<8x128xf32>
    %171 = math.tanh %170 : vector<8x128xf32>
    %cst_67 = arith.constant 5.000000e-01 : f32
    %172 = vector.broadcast %cst_67 : f32 to vector<8x128xf32>
    %173 = arith.mulf %172, %171 : vector<8x128xf32>
    %cst_68 = arith.constant 5.000000e-01 : f32
    %174 = vector.broadcast %cst_68 : f32 to vector<8x128xf32>
    %175 = arith.addf %173, %174 : vector<8x128xf32>
    %176 = vector.extract_strided_slice %167 {offsets = [0, 128], sizes = [8, 128], strides = [1, 1]} : vector<8x512xf32> to vector<8x128xf32>
    %cst_69 = arith.constant 5.000000e-01 : f32
    %177 = vector.broadcast %cst_69 : f32 to vector<8x128xf32>
    %178 = arith.mulf %177, %176 : vector<8x128xf32>
    %179 = math.tanh %178 : vector<8x128xf32>
    %cst_70 = arith.constant 5.000000e-01 : f32
    %180 = vector.broadcast %cst_70 : f32 to vector<8x128xf32>
    %181 = arith.mulf %180, %179 : vector<8x128xf32>
    %cst_71 = arith.constant 5.000000e-01 : f32
    %182 = vector.broadcast %cst_71 : f32 to vector<8x128xf32>
    %183 = arith.addf %181, %182 : vector<8x128xf32>
    %184 = vector.extract_strided_slice %167 {offsets = [0, 256], sizes = [8, 128], strides = [1, 1]} : vector<8x512xf32> to vector<8x128xf32>
    %185 = math.tanh %184 : vector<8x128xf32>
    %186 = vector.extract_strided_slice %167 {offsets = [0, 384], sizes = [8, 128], strides = [1, 1]} : vector<8x512xf32> to vector<8x128xf32>
    %cst_72 = arith.constant 5.000000e-01 : f32
    %187 = vector.broadcast %cst_72 : f32 to vector<8x128xf32>
    %188 = arith.mulf %187, %186 : vector<8x128xf32>
    %189 = math.tanh %188 : vector<8x128xf32>
    %cst_73 = arith.constant 5.000000e-01 : f32
    %190 = vector.broadcast %cst_73 : f32 to vector<8x128xf32>
    %191 = arith.mulf %190, %189 : vector<8x128xf32>
    %cst_74 = arith.constant 5.000000e-01 : f32
    %192 = vector.broadcast %cst_74 : f32 to vector<8x128xf32>
    %193 = arith.addf %191, %192 : vector<8x128xf32>
    %194 = arith.mulf %183, %155 : vector<8x128xf32>
    %195 = arith.mulf %175, %185 : vector<8x128xf32>
    %196 = arith.addf %194, %195 : vector<8x128xf32>
    %197 = math.tanh %196 : vector<8x128xf32>
    %198 = arith.mulf %193, %197 : vector<8x128xf32>
    %c3_i32 = arith.constant 3 : i32
    %199 = arith.addi %3, %c3_i32 : i32
    %200 = vector.broadcast %199 : i32 to vector<8x1xi32>
    %201 = arith.cmpi slt, %200, %4 : vector<8x1xi32>
    %202 = vector.shape_cast %201 : vector<8x1xi1> to vector<8x1xi1>
    %203 = vector.broadcast %202 : vector<8x1xi1> to vector<8x128xi1>
    %204 = arith.select %203, %198, %152 : vector<8x128xi1>, vector<8x128xf32>
    %205 = vector.shape_cast %201 : vector<8x1xi1> to vector<8x1xi1>
    %206 = vector.broadcast %205 : vector<8x1xi1> to vector<8x128xi1>
    %207 = arith.select %206, %196, %155 : vector<8x128xi1>, vector<8x128xf32>
    %cst_75 = arith.constant 0.000000e+00 : f32
    %208 = vector.shape_cast %201 : vector<8x1xi1> to vector<8x1xi1>
    %209 = vector.broadcast %208 : vector<8x1xi1> to vector<8x128xi1>
    %210 = vector.broadcast %cst_75 : f32 to vector<8x128xf32>
    %211 = arith.select %209, %198, %210 : vector<8x128xi1>, vector<8x128xf32>
    %c3_76 = arith.constant 3 : index
    %c0_77 = arith.constant 0 : index
    %c0_78 = arith.constant 0 : index
    %212 = vector.load %arg5[%c3_76, %c0_77, %c0_78] : memref<4x8x128xf32, #tpu.memory_space<vmem>>, vector<1x8x128xf32>
    %213 = vector.shape_cast %212 : vector<1x8x128xf32> to vector<8x128xf32>
    %214 = vector.shape_cast %211 : vector<8x128xf32> to vector<1x8x128xf32>
    tpu.vector_store %arg5[%c3_76, %c0_77, %c0_78], %214 {strides = array<i32>} : memref<4x8x128xf32, #tpu.memory_space<vmem>>, vector<1x8x128xf32>,
    %c0_79 = arith.constant 0 : index
    %c0_80 = arith.constant 0 : index
    %215 = vector.load %arg7[%c0_79, %c0_80] : memref<8x128xf32, #tpu.memory_space<vmem>>, vector<8x128xf32>
    tpu.vector_store %arg7[%c0_79, %c0_80], %204 {strides = array<i32>} : memref<8x128xf32, #tpu.memory_space<vmem>>, vector<8x128xf32>,
    %c0_81 = arith.constant 0 : index
    %c0_82 = arith.constant 0 : index
    %216 = vector.load %arg8[%c0_81, %c0_82] : memref<8x128xf32, #tpu.memory_space<vmem>>, vector<8x128xf32>
    tpu.vector_store %arg8[%c0_81, %c0_82], %207 {strides = array<i32>} : memref<8x128xf32, #tpu.memory_space<vmem>>, vector<8x128xf32>,
    return
  }
  func.func @transform_0(%arg0: i32, %arg1: i32) -> (i32, i32, i32) {
    %c0_i32 = arith.constant 0 : i32
    %c0_i32_0 = arith.constant 0 : i32
    return %arg1, %arg0, %c0_i32 : i32, i32, i32
  }
  func.func @transform_2(%arg0: i32, %arg1: i32) -> (i32, i32) {
    %c0_i32 = arith.constant 0 : i32
    %c0_i32_0 = arith.constant 0 : i32
    return %arg0, %c0_i32 : i32, i32
  }
  func.func @transform_3(%arg0: i32, %arg1: i32) -> (i32, i32, i32) {
    %c0_i32 = arith.constant 0 : i32
    %c0_i32_0 = arith.constant 0 : i32
    return %arg1, %arg0, %c0_i32 : i32, i32, i32
  }
}

</mosaic_0001>

<llo_original>
// kernel: tpu_custom_call.1
$region0: #{tpu_custom_call.1}
  #allocation0 [shape = 'u32[]', space=smem, size = 0x4, offset = 0x4, fixed_abs, tag = 'smem constant byte address 0x4 - core index']
  #allocation1 [shape = 'u32[72,128]{1,0:T(1,128)}', space=vmem, size = 0x9000, scoped, tag = 'internal scratch']
  #allocation2 [shape = 'f32[128,512]{1,0:T(8,128)}', space=vmem, size = 0x40000, scoped, tag = 'scratch operand']
  #allocation3 [shape = 'f32[8,128]{1,0:T(8,128)}', space=vmem, size = 0x1000, scoped, tag = 'scratch operand']
  #allocation4 [shape = 'f32[8,128]{1,0:T(8,128)}', space=vmem, size = 0x1000, scoped, tag = 'scratch operand']
  #allocation10 [shape = 's32[]', space=sflag, size = 0x4, offset = 0, fixed_abs, tag = 'sflag constant byte address 0x0 - dummy sync flag']
  #allocation11 [shape = 's32[]', space=sflag, size = 0x4, offset = 0, fixed_abs, tag = 'sflag constant byte address 0x0 - dummy sync flag']
  #allocation12 [shape = 'u32[]', space=smem, size = 0x4, offset = 0x44, fixed_abs, tag = 'smem constant byte address 0x44 - assertion arg 0']
  #allocation13 [shape = 'u32[]', space=smem, size = 0x4, offset = 0x48, fixed_abs, tag = 'smem constant byte address 0x48 - assertion arg 1']
  %s0 = inlined_call_operand.hbm [shape: f32[8,16,512], index: 0, kind: input, shape index: {}]
  %s1 = inlined_call_operand.hbm [shape: f32[128,512], index: 1, kind: input, shape index: {}]
  %s2 = inlined_call_operand.vmem [shape: s32[16,1], index: 2, kind: input, shape index: {}]
  %s3 = inlined_call_operand.hbm [shape: f32[8,16,128], index: 3, kind: output, shape index: {}]
  %s4 = sld [smem:[#allocation0]]
  $region54: #{tpu_custom_call.1} parent=0
    _
  %s6 = ssub.s32 1, %s4
  %s7 = scalar_select 0, %s6, %s4
  $region1: #{tpu_custom_call.1} parent=0
    #allocation5 [shape = 'u8[131072]{0}', space=vmem, size = 0x20000, scoped, tag = 'input window, operand 0']
    #allocation6 [shape = 's32[2]{0}', space=sflag, size = 0x8, scoped, tag = 'scoped memory for tpu_custom_call.1']
    #allocation7 [shape = 's32[2]{0}', space=sflag, size = 0x8, scoped, tag = 'scoped memory for tpu_custom_call.1']
    #allocation8 [shape = 'u8[32768]{0}', space=vmem, size = 0x8000, scoped, tag = 'output window, operand 0']
    %8 = vsyncpa [#allocation6], 0
    %s9 = scalar_lea.sflag [#allocation6], 1
    %10 = vsyncpa %s9, 0
    %11 = vsyncpa [#allocation7], 0
    %s12 = scalar_lea.sflag [#allocation7], 1
    %13 = vsyncpa %s12, 0
    loop: start=0, step=1, limit=6
    $region2: #{tpu_custom_call.1} parent=1 // loop_pre_header
      _
    $region3: #{tpu_custom_call.1} parent=1 // loop_header
      %s15 = sphi 0, %s19
      %p16 = scmp.ge.s32.totalorder %s15, 6
      %s22 = sphi 0, %s34
      %s23 = sphi 0, %s30
      %s24 = sphi 0, %s22
      %s25 = sphi 0, %s23
      %s26 = sphi 0, %s24
      %s27 = sphi 0, %s25
      %s39 = sphi 0, %s41
      %s42 = sphi 0, %s39
      %s43 = sphi 0, %s42
      %s59 = sphi 0, %s43
      %s65 = sphi 0, %s67
      %s68 = sphi 0, %s65
      %s69 = sphi 0, %s68
      %s85 = sphi 0, %s69
      %s93 = sphi 0, %s95
      %s96 = sphi 0, %s93
      %s97 = sphi 0, %s96
      %s113 = sphi 0, %s97
    $region4: #{tpu_custom_call.1} parent=1 // loop_header_branch
      %18 = sbr.rel (%p16) target = $region8
    $region5: #{tpu_custom_call.1} parent=1 // loop_body
      %s20 = ssub.s32 %s15, 1
      %s21 = ssub.s32 %s15, 2
      %s28 = sadd.s32 1, %s23
      %p29 = scmp.ge.s32.totalorder %s28, 2
      %s30 = scalar_select %p29, 0, %s28
      %s31 = sadd.s32 1, %s22
      %s32 = scalar_select %p29, %s31, %s22
      %p33 = scmp.ge.s32.totalorder %s32, 2
      %s34 = scalar_select %p33, 0, %s32
      %s35 = ssub.s32 %s23, %s30
      %s36 = ssub.s32 %s22, %s34
      %s37 = sor.u32 %s35, %s36
      %p38 = scmp.eq.s32.totalorder %s37, 0
      %s40 = sadd.s32 %s39, 1
      %s41 = scalar_select %p38, %s39, %s40
      %p44 = pneg %p38
      %p45 = scmp.eq.s32.totalorder %s15, 3
      %p46 = por %p44, %p45
      %p47 = scmp.ne.s32.totalorder %s39, %s42
      %p48 = scmp.eq.s32.totalorder %s15, 0
      %p49 = por %p47, %p48
      %p50 = scmp.ne.s32.totalorder %s39, %s42
      %p51 = scmp.eq.s32.totalorder %s20, 3
      %p52 = por %p50, %p51
      %p53 = scmp.ne.s32.totalorder %s42, %s43
      %p54 = scmp.eq.s32.totalorder %s20, 0
      %p55 = por %p53, %p54
      %p56 = scmp.ne.s32.totalorder %s42, %s43
      %p57 = scmp.eq.s32.totalorder %s21, 3
      %p58 = por %p56, %p57
      %p60 = scmp.ne.s32.totalorder %s43, %s59
      %p61 = scmp.eq.s32.totalorder %s21, 0
      %p62 = por %p60, %p61
      %s63 = ssub.s32 %s22, %s34
      %p64 = scmp.eq.s32.totalorder %s63, 0
      %s66 = sadd.s32 %s65, 1
      %s67 = scalar_select %p64, %s65, %s66
      %p70 = pneg %p64
      %p71 = scmp.eq.s32.totalorder %s15, 3
      %p72 = por %p70, %p71
      %p73 = scmp.ne.s32.totalorder %s65, %s68
      %p74 = scmp.eq.s32.totalorder %s15, 0
      %p75 = por %p73, %p74
      %p76 = scmp.ne.s32.totalorder %s65, %s68
      %p77 = scmp.eq.s32.totalorder %s20, 3
      %p78 = por %p76, %p77
      %p79 = scmp.ne.s32.totalorder %s68, %s69
      %p80 = scmp.eq.s32.totalorder %s20, 0
      %p81 = por %p79, %p80
      %p82 = scmp.ne.s32.totalorder %s68, %s69
      %p83 = scmp.eq.s32.totalorder %s21, 3
      %p84 = por %p82, %p83
      %p86 = scmp.ne.s32.totalorder %s69, %s85
      %p87 = scmp.eq.s32.totalorder %s21, 0
      %p88 = por %p86, %p87
      %s89 = ssub.s32 %s23, %s30
      %s90 = ssub.s32 %s22, %s34
      %s91 = sor.u32 %s89, %s90
      %p92 = scmp.eq.s32.totalorder %s91, 0
      %s94 = sadd.s32 %s93, 1
      %s95 = scalar_select %p92, %s93, %s94
      %p98 = pneg %p92
      %p99 = scmp.eq.s32.totalorder %s15, 3
      %p100 = por %p98, %p99
      %p101 = scmp.ne.s32.totalorder %s93, %s96
      %p102 = scmp.eq.s32.totalorder %s15, 0
      %p103 = por %p101, %p102
      %p104 = scmp.ne.s32.totalorder %s93, %s96
      %p105 = scmp.eq.s32.totalorder %s20, 3
      %p106 = por %p104, %p105
      %p107 = scmp.ne.s32.totalorder %s96, %s97
      %p108 = scmp.eq.s32.totalorder %s20, 0
      %p109 = por %p107, %p108
      %p110 = scmp.ne.s32.totalorder %s96, %s97
      %p111 = scmp.eq.s32.totalorder %s21, 3
      %p112 = por %p110, %p111
      %p114 = scmp.ne.s32.totalorder %s97, %s113
      %p115 = scmp.eq.s32.totalorder %s21, 0
      %p116 = por %p114, %p115
      %p117 = scmp.le.s32.totalorder 1, %s15
      %p118 = scmp.lt.s32.totalorder %s15, 5
      %p119 = pnand %p117, %p118
      %p120 = pneg %p119
      // Predicated region
      $region9: #{tpu_custom_call.1} parent=5 // pred_check
        _
      $region10: #{tpu_custom_call.1} parent=5 // pred_check_branch
        %122 = sbr.rel (%p119) target = $region12
      $region11: #{tpu_custom_call.1} parent=5 // pred_region
        %s123 = ssub.s32 %s15, 1
      $region12: #{tpu_custom_call.1} parent=5 // pred_fallthru
        _
      %p124 = scmp.lt.s32.totalorder %s15, 4
      // Predicated region
      $region13: #{tpu_custom_call.1} parent=5 // pred_check
        %p125 = pneg %p124
      $region14: #{tpu_custom_call.1} parent=5 // pred_check_branch
        %127 = sbr.rel (%p125) target = $region16
      $region15: #{tpu_custom_call.1} parent=5 // pred_region
        // Predicated region
        $region17: #{tpu_custom_call.1} parent=15 // pred_check
          %p128 = pneg %p49
        $region18: #{tpu_custom_call.1} parent=15 // pred_check_branch
          %130 = sbr.rel (%p128) target = $region20
        $region19: #{tpu_custom_call.1} parent=15 // pred_region
          %s131 = sand.u32 %s39, 1
          %s132 = scalar_lea.sflag [#allocation6], %s131
          %s133 = sand.u32 %s39, 1
          %s134 = smul.addr %s133, 128
          %s135 = scalar_lea.vmem [#allocation5], %s134
          %s136 = smul.u32 4, %s23
          %138 = vsyncadd %s132, 0
          %s139 = smul.addr %s22, 4
          %s140 = smul.addr %s136, 8
          %s141 = sadd.s32 %s139, %s140
          %s142 = smul.addr %s141, 8
          %s143 = scalar_lea.hbm %s0, %s142
          %s144 = sshll.u32 %s143, 4
          %s145 = int_to_ptr.hbm [resolvable:$true] %s144
          %s146 = sshll.u32 %s135, 4
          %s147 = int_to_ptr.vmem [resolvable:$true] %s146
          %152 = dma.hbm_to_vmem [thread:$0]  %s145, 2048, %s147, %s132, 1024, 512, 32
        $region20: #{tpu_custom_call.1} parent=15 // pred_fallthru
          _
        // Predicated region
        $region21: #{tpu_custom_call.1} parent=15 // pred_check
          %p153 = pneg %p75
        $region22: #{tpu_custom_call.1} parent=15 // pred_check_branch
          %155 = sbr.rel (%p153) target = $region24
        $region23: #{tpu_custom_call.1} parent=15 // pred_region
          %p156 = scmp.lt.s32.totalorder %s22, 1
          %s157 = scalar_select %p156, %s22, 1
          %s158 = smul.addr %s157, 8
          %s159 = scalar_lea.vmem %s2, %s158
        $region24: #{tpu_custom_call.1} parent=15 // pred_fallthru
          _
      $region16: #{tpu_custom_call.1} parent=5 // pred_fallthru
        _
      %p160 = scmp.le.s32.totalorder 1, %s15
      %p161 = scmp.lt.s32.totalorder %s15, 5
      %p162 = pnand %p160, %p161
      %p163 = pneg %p162
      // Predicated region
      $region25: #{tpu_custom_call.1} parent=5 // pred_check
        _
      $region26: #{tpu_custom_call.1} parent=5 // pred_check_branch
        %165 = sbr.rel (%p162) target = $region28
      $region27: #{tpu_custom_call.1} parent=5 // pred_region
        %s166 = ssub.s32 %s15, 1
        %s167 = sand.u32 %s42, 1
        %s168 = scalar_lea.sflag [#allocation6], %s167
        %s169 = sand.u32 %s42, 1
        %s170 = smul.addr %s169, 128
        %s171 = scalar_lea.vmem [#allocation5], %s170
        // Predicated region
        $region29: #{tpu_custom_call.1} parent=27 // pred_check
          %p172 = pneg %p55
        $region30: #{tpu_custom_call.1} parent=27 // pred_check_branch
          %174 = sbr.rel (%p172) target = $region32
        $region31: #{tpu_custom_call.1} parent=27 // pred_region
          %176 = dma.done %s168, 2048
        $region32: #{tpu_custom_call.1} parent=27 // pred_fallthru
          _
        %s177 = sand.u32 %s42, 1
        %s178 = scalar_lea.sflag [#allocation6], %s177
        %s179 = sand.u32 %s42, 1
        %s180 = smul.addr %s179, 128
        %s181 = scalar_lea.vmem [#allocation5], %s180
        %p182 = pneg %p55
        %p183 = pneg %p52
        %p184 = scmp.lt.s32.totalorder %s24, 1
        %s185 = scalar_select %p184, %s24, 1
        %s186 = smul.addr %s185, 8
        %s187 = scalar_lea.vmem %s2, %s186
        %p188 = pneg %p81
        %p189 = pneg %p78
        %p190 = pneg %p109
        %p191 = pneg %p106
        %s192 = sand.u32 %s96, 1
        %s193 = scalar_lea.sflag [#allocation7], %s192
        %s194 = sand.u32 %s96, 1
        %s195 = smul.addr %s194, 32
        %s196 = scalar_lea.vmem [#allocation8], %s195
        %s197 = smul.u32 4, %s25
        %p198 = scmp.lt.s32.totalorder %s24, 1
        %s199 = scalar_select %p198, %s24, 1
        %s200 = smul.addr %s199, 8
        %s201 = scalar_lea.vmem %s2, %s200
        %s202 = smul.u32 4, %s25
        %p203 = scmp.eq.s32.totalorder %s25, 0
        // Predicated region
        $region33: #{tpu_custom_call.1} parent=27 // pred_check
          %p204 = pneg %p203
        $region34: #{tpu_custom_call.1} parent=27 // pred_check_branch
          %206 = sbr.rel (%p204) target = $region36
        $region35: #{tpu_custom_call.1} parent=27 // pred_region
          $region37: #{tpu_custom_call.1} parent=35
            #allocation9 [shape = 's32[1]{0}', space=sflag, size = 0x4, scoped, tag = 'scoped memory for tpu_custom_call.1']
            // Predicated region
            $region38: #{tpu_custom_call.1} parent=37 // pred_check
              _
            $region39: #{tpu_custom_call.1} parent=37 // pred_check_branch
              %208 = sbr.rel target = $region41
            $region40: #{tpu_custom_call.1} parent=37 // pred_region
              %209 = sst [smem:[#allocation12]] [#allocation11]
              %210 = sst [smem:[#allocation13]] [#allocation10]
            $region41: #{tpu_custom_call.1} parent=37 // pred_fallthru
              _
            %212 = shalt.err (0)
            %s214 = sshll.u32 %s1, 4
            %s215 = int_to_ptr.hbm [resolvable:$true] %s214
            %s216 = sshll.u32 [#allocation2], 4
            %s217 = int_to_ptr.vmem [resolvable:$true] %s216
            %219 = dma.hbm_to_vmem [thread:$0]  %s215, 8192, %s217, [#allocation9]
            %s220 = smul.u32 8, 16
            %s221 = smul.u32 %s220, 4
            %s222 = sshll.u32 %s221, 4
            %223 = dma.done [#allocation9], %s222
          %224 = vst [vmem:[#allocation3] sm:$0xff] 0.0
          %225 = vst [vmem:[#allocation4] sm:$0xff] 0.0
        $region36: #{tpu_custom_call.1} parent=27 // pred_fallthru
          _
        %s226 = smul.u32 %s25, 4
        %v227 = vld [vmem:[%s201] sm:$0xff]
        %v228 = vld [vmem:[#allocation3] sm:$0xff]
        %v229 = vld [vmem:[#allocation4] sm:$0xff]
        %v230 = vld [vmem:[%s171] sm:$0xff]
        %v231 = vld [vmem:[%s171 + $0x8] sm:$0xff]
        %v232 = vld [vmem:[%s171 + $0x10] sm:$0xff]
        %v233 = vld [vmem:[%s171 + $0x18] sm:$0xff]
        %v234 = vld [vmem:[#allocation2] sm:$0xff]
        %v235 = vld [vmem:[#allocation2 + $0x8] sm:$0xff]
        %v236 = vld [vmem:[#allocation2 + $0x10] sm:$0xff]
        %v237 = vld [vmem:[#allocation2 + $0x18] sm:$0xff]
        %v238 = vld [vmem:[#allocation2 + $0x20] sm:$0xff]
        %v239 = vld [vmem:[#allocation2 + $0x28] sm:$0xff]
        %v240 = vld [vmem:[#allocation2 + $0x30] sm:$0xff]
        %v241 = vld [vmem:[#allocation2 + $0x38] sm:$0xff]
        %v242 = vld [vmem:[#allocation2 + $0x40] sm:$0xff]
        %v243 = vld [vmem:[#allocation2 + $0x48] sm:$0xff]
        %v244 = vld [vmem:[#allocation2 + $0x50] sm:$0xff]
        %v245 = vld [vmem:[#allocation2 + $0x58] sm:$0xff]
        %v246 = vld [vmem:[#allocation2 + $0x60] sm:$0xff]
        %v247 = vld [vmem:[#allocation2 + $0x68] sm:$0xff]
        %v248 = vld [vmem:[#allocation2 + $0x70] sm:$0xff]
        %v249 = vld [vmem:[#allocation2 + $0x78] sm:$0xff]
        %v250 = vld [vmem:[#allocation2 + $0x80] sm:$0xff]
        %v251 = vld [vmem:[#allocation2 + $0x88] sm:$0xff]
        %v252 = vld [vmem:[#allocation2 + $0x90] sm:$0xff]
        %v253 = vld [vmem:[#allocation2 + $0x98] sm:$0xff]
        %v254 = vld [vmem:[#allocation2 + $0xa0] sm:$0xff]
        %v255 = vld [vmem:[#allocation2 + $0xa8] sm:$0xff]
        %v256 = vld [vmem:[#allocation2 + $0xb0] sm:$0xff]
        %v257 = vld [vmem:[#allocation2 + $0xb8] sm:$0xff]
        %v258 = vld [vmem:[#allocation2 + $0xc0] sm:$0xff]
        %v259 = vld [vmem:[#allocation2 + $0xc8] sm:$0xff]
        %v260 = vld [vmem:[#allocation2 + $0xd0] sm:$0xff]
        %v261 = vld [vmem:[#allocation2 + $0xd8] sm:$0xff]
        %v262 = vld [vmem:[#allocation2 + $0xe0] sm:$0xff]
        %v263 = vld [vmem:[#allocation2 + $0xe8] sm:$0xff]
        %v264 = vld [vmem:[#allocation2 + $0xf0] sm:$0xff]
        %v265 = vld [vmem:[#allocation2 + $0xf8] sm:$0xff]
        %v266 = vld [vmem:[#allocation2 + $0x100] sm:$0xff]
        %v267 = vld [vmem:[#allocation2 + $0x108] sm:$0xff]
        %v268 = vld [vmem:[#allocation2 + $0x110] sm:$0xff]
        %v269 = vld [vmem:[#allocation2 + $0x118] sm:$0xff]
        %v270 = vld [vmem:[#allocation2 + $0x120] sm:$0xff]
        %v271 = vld [vmem:[#allocation2 + $0x128] sm:$0xff]
        %v272 = vld [vmem:[#allocation2 + $0x130] sm:$0xff]
        %v273 = vld [vmem:[#allocation2 + $0x138] sm:$0xff]
        %v274 = vld [vmem:[#allocation2 + $0x140] sm:$0xff]
        %v275 = vld [vmem:[#allocation2 + $0x148] sm:$0xff]
        %v276 = vld [vmem:[#allocation2 + $0x150] sm:$0xff]
        %v277 = vld [vmem:[#allocation2 + $0x158] sm:$0xff]
        %v278 = vld [vmem:[#allocation2 + $0x160] sm:$0xff]
        %v279 = vld [vmem:[#allocation2 + $0x168] sm:$0xff]
        %v280 = vld [vmem:[#allocation2 + $0x170] sm:$0xff]
        %v281 = vld [vmem:[#allocation2 + $0x178] sm:$0xff]
        %v282 = vld [vmem:[#allocation2 + $0x180] sm:$0xff]
        %v283 = vld [vmem:[#allocation2 + $0x188] sm:$0xff]
        %v284 = vld [vmem:[#allocation2 + $0x190] sm:$0xff]
        %v285 = vld [vmem:[#allocation2 + $0x198] sm:$0xff]
        %v286 = vld [vmem:[#allocation2 + $0x1a0] sm:$0xff]
        %v287 = vld [vmem:[#allocation2 + $0x1a8] sm:$0xff]
        %v288 = vld [vmem:[#allocation2 + $0x1b0] sm:$0xff]
        %v289 = vld [vmem:[#allocation2 + $0x1b8] sm:$0xff]
        %v290 = vld [vmem:[#allocation2 + $0x1c0] sm:$0xff]
        %v291 = vld [vmem:[#allocation2 + $0x1c8] sm:$0xff]
        %v292 = vld [vmem:[#allocation2 + $0x1d0] sm:$0xff]
        %v293 = vld [vmem:[#allocation2 + $0x1d8] sm:$0xff]
        %v294 = vld [vmem:[#allocation2 + $0x1e0] sm:$0xff]
        %v295 = vld [vmem:[#allocation2 + $0x1e8] sm:$0xff]
        %v296 = vld [vmem:[#allocation2 + $0x1f0] sm:$0xff]
        %v297 = vld [vmem:[#allocation2 + $0x1f8] sm:$0xff]
        %298 = vmatpush.msra.mxu0 %v294
        %299 = vmatpush.msra.mxu0 %v290
        %300 = vmatpush.msra.mxu0 %v286
        %301 = vmatpush.msra.mxu0 %v282
        %302 = vmatpush.msra.mxu0 %v278
        %303 = vmatpush.msra.mxu0 %v274
        %304 = vmatpush.msra.mxu0 %v270
        %305 = vmatpush.msra.mxu0 %v266
        %306 = vmatpush.msra.mxu0 %v262
        %307 = vmatpush.msra.mxu0 %v258
        %308 = vmatpush.msra.mxu0 %v254
        %309 = vmatpush.msra.mxu0 %v250
        %310 = vmatpush.msra.mxu0 %v246
        %311 = vmatpush.msra.mxu0 %v242
        %312 = vmatpush.msra.mxu0 %v238
        %313 = vmatpush.msra.mxu0 %v234
        %314 = vmatmul.f32.gmra.mxu0 %v228
        %v315 = vpop.f32.mrf.mxu0
        %v316 = vadd.f32 0.0, %v315
        %317 = vdwg.mxu0
        %318 = vmatpush.msra.mxu0 %v295
        %319 = vmatpush.msra.mxu0 %v291
        %320 = vmatpush.msra.mxu0 %v287
        %321 = vmatpush.msra.mxu0 %v283
        %322 = vmatpush.msra.mxu0 %v279
        %323 = vmatpush.msra.mxu0 %v275
        %324 = vmatpush.msra.mxu0 %v271
        %325 = vmatpush.msra.mxu0 %v267
        %326 = vmatpush.msra.mxu0 %v263
        %327 = vmatpush.msra.mxu0 %v259
        %328 = vmatpush.msra.mxu0 %v255
        %329 = vmatpush.msra.mxu0 %v251
        %330 = vmatpush.msra.mxu0 %v247
        %331 = vmatpush.msra.mxu0 %v243
        %332 = vmatpush.msra.mxu0 %v239
        %333 = vmatpush.msra.mxu0 %v235
        %334 = vmatmul.f32.gmra.mxu0 %v228
        %v335 = vpop.f32.mrf.mxu0
        %v336 = vadd.f32 0.0, %v335
        %337 = vdwg.mxu0
        %338 = vmatpush.msra.mxu0 %v296
        %339 = vmatpush.msra.mxu0 %v292
        %340 = vmatpush.msra.mxu0 %v288
        %341 = vmatpush.msra.mxu0 %v284
        %342 = vmatpush.msra.mxu0 %v280
        %343 = vmatpush.msra.mxu0 %v276
        %344 = vmatpush.msra.mxu0 %v272
        %345 = vmatpush.msra.mxu0 %v268
        %346 = vmatpush.msra.mxu0 %v264
        %347 = vmatpush.msra.mxu0 %v260
        %348 = vmatpush.msra.mxu0 %v256
        %349 = vmatpush.msra.mxu0 %v252
        %350 = vmatpush.msra.mxu0 %v248
        %351 = vmatpush.msra.mxu0 %v244
        %352 = vmatpush.msra.mxu0 %v240
        %353 = vmatpush.msra.mxu0 %v236
        %354 = vmatmul.f32.gmra.mxu0 %v228
        %v355 = vpop.f32.mrf.mxu0
        %v356 = vadd.f32 0.0, %v355
        %357 = vdwg.mxu0
        %358 = vmatpush.msra.mxu0 %v297
        %359 = vmatpush.msra.mxu0 %v293
        %360 = vmatpush.msra.mxu0 %v289
        %361 = vmatpush.msra.mxu0 %v285
        %362 = vmatpush.msra.mxu0 %v281
        %363 = vmatpush.msra.mxu0 %v277
        %364 = vmatpush.msra.mxu0 %v273
        %365 = vmatpush.msra.mxu0 %v269
        %366 = vmatpush.msra.mxu0 %v265
        %367 = vmatpush.msra.mxu0 %v261
        %368 = vmatpush.msra.mxu0 %v257
        %369 = vmatpush.msra.mxu0 %v253
        %370 = vmatpush.msra.mxu0 %v249
        %371 = vmatpush.msra.mxu0 %v245
        %372 = vmatpush.msra.mxu0 %v241
        %373 = vmatpush.msra.mxu0 %v237
        %374 = vmatmul.f32.gmra.mxu0 %v228
        %v375 = vpop.f32.mrf.mxu0
        %v376 = vadd.f32 0.0, %v375
        %377 = vdwg.mxu0
        %v378 = vadd.f32 %v230, %v316
        %v379 = vadd.f32 %v231, %v336
        %v380 = vadd.f32 %v232, %v356
        %v381 = vadd.f32 %v233, %v376
        %v382 = vmul.f32 %v378, 0.5
        %v383 = vtanh.pop %v382
        %v384 = vmul.f32 %v383, 0.5
        %v385 = vadd.f32 %v384, 0.5
        %v386 = vmul.f32 %v379, 0.5
        %v387 = vtanh.pop %v386
        %v388 = vmul.f32 %v387, 0.5
        %v389 = vadd.f32 %v388, 0.5
        %v390 = vtanh.pop %v380
        %v391 = vmul.f32 %v381, 0.5
        %v392 = vtanh.pop %v391
        %v393 = vmul.f32 %v392, 0.5
        %v394 = vadd.f32 %v393, 0.5
        %v395 = vmul.f32 %v389, %v229
        %v396 = vmul.f32 %v385, %v390
        %v397 = vadd.f32 %v395, %v396
        %v398 = vtanh.pop %v397
        %v399 = vmul.f32 %v394, %v398
        %v400 = vstv %s226
        %vm401 = vcmp.lt.s32.totalorder %v400, %v227
        %v402 = vsel %vm401, 1, 0
        %403 = vset.pattern.permute.xlu0 0
        %404 = vperm.xlu0 %403, %v402
        %v405 = vpop.permute.xlu0 %404
        %vm406 = vcmp.eq.s32.totalorder %v405, 1
        %v407 = vsel %vm406, %v399, %v228
        %v408 = vsel %vm406, %v397, %v229
        %v409 = vsel %vm406, %v399, 0.0
        %410 = vst [vmem:[%s196] sm:$0xff] %v409
        %s411 = scalar_lea.vmem %s171, 32 [#allocation5]
        %v412 = vld [vmem:[%s411] sm:$0xff]
        %v413 = vld [vmem:[%s411 + $0x8] sm:$0xff]
        %v414 = vld [vmem:[%s411 + $0x10] sm:$0xff]
        %v415 = vld [vmem:[%s411 + $0x18] sm:$0xff]
        %v416 = vld [vmem:[#allocation2] sm:$0xff]
        %v417 = vld [vmem:[#allocation2 + $0x8] sm:$0xff]
        %v418 = vld [vmem:[#allocation2 + $0x10] sm:$0xff]
        %v419 = vld [vmem:[#allocation2 + $0x18] sm:$0xff]
        %v420 = vld [vmem:[#allocation2 + $0x20] sm:$0xff]
        %v421 = vld [vmem:[#allocation2 + $0x28] sm:$0xff]
        %v422 = vld [vmem:[#allocation2 + $0x30] sm:$0xff]
        %v423 = vld [vmem:[#allocation2 + $0x38] sm:$0xff]
        %v424 = vld [vmem:[#allocation2 + $0x40] sm:$0xff]
        %v425 = vld [vmem:[#allocation2 + $0x48] sm:$0xff]
        %v426 = vld [vmem:[#allocation2 + $0x50] sm:$0xff]
        %v427 = vld [vmem:[#allocation2 + $0x58] sm:$0xff]
        %v428 = vld [vmem:[#allocation2 + $0x60] sm:$0xff]
        %v429 = vld [vmem:[#allocation2 + $0x68] sm:$0xff]
        %v430 = vld [vmem:[#allocation2 + $0x70] sm:$0xff]
        %v431 = vld [vmem:[#allocation2 + $0x78] sm:$0xff]
        %v432 = vld [vmem:[#allocation2 + $0x80] sm:$0xff]
        %v433 = vld [vmem:[#allocation2 + $0x88] sm:$0xff]
        %v434 = vld [vmem:[#allocation2 + $0x90] sm:$0xff]
        %v435 = vld [vmem:[#allocation2 + $0x98] sm:$0xff]
        %v436 = vld [vmem:[#allocation2 + $0xa0] sm:$0xff]
        %v437 = vld [vmem:[#allocation2 + $0xa8] sm:$0xff]
        %v438 = vld [vmem:[#allocation2 + $0xb0] sm:$0xff]
        %v439 = vld [vmem:[#allocation2 + $0xb8] sm:$0xff]
        %v440 = vld [vmem:[#allocation2 + $0xc0] sm:$0xff]
        %v441 = vld [vmem:[#allocation2 + $0xc8] sm:$0xff]
        %v442 = vld [vmem:[#allocation2 + $0xd0] sm:$0xff]
        %v443 = vld [vmem:[#allocation2 + $0xd8] sm:$0xff]
        %v444 = vld [vmem:[#allocation2 + $0xe0] sm:$0xff]
        %v445 = vld [vmem:[#allocation2 + $0xe8] sm:$0xff]
        %v446 = vld [vmem:[#allocation2 + $0xf0] sm:$0xff]
        %v447 = vld [vmem:[#allocation2 + $0xf8] sm:$0xff]
        %v448 = vld [vmem:[#allocation2 + $0x100] sm:$0xff]
        %v449 = vld [vmem:[#allocation2 + $0x108] sm:$0xff]
        %v450 = vld [vmem:[#allocation2 + $0x110] sm:$0xff]
        %v451 = vld [vmem:[#allocation2 + $0x118] sm:$0xff]
        %v452 = vld [vmem:[#allocation2 + $0x120] sm:$0xff]
        %v453 = vld [vmem:[#allocation2 + $0x128] sm:$0xff]
        %v454 = vld [vmem:[#allocation2 + $0x130] sm:$0xff]
        %v455 = vld [vmem:[#allocation2 + $0x138] sm:$0xff]
        %v456 = vld [vmem:[#allocation2 + $0x140] sm:$0xff]
        %v457 = vld [vmem:[#allocation2 + $0x148] sm:$0xff]
        %v458 = vld [vmem:[#allocation2 + $0x150] sm:$0xff]
        %v459 = vld [vmem:[#allocation2 + $0x158] sm:$0xff]
        %v460 = vld [vmem:[#allocation2 + $0x160] sm:$0xff]
        %v461 = vld [vmem:[#allocation2 + $0x168] sm:$0xff]
        %v462 = vld [vmem:[#allocation2 + $0x170] sm:$0xff]
        %v463 = vld [vmem:[#allocation2 + $0x178] sm:$0xff]
        %v464 = vld [vmem:[#allocation2 + $0x180] sm:$0xff]
        %v465 = vld [vmem:[#allocation2 + $0x188] sm:$0xff]
        %v466 = vld [vmem:[#allocation2 + $0x190] sm:$0xff]
        %v467 = vld [vmem:[#allocation2 + $0x198] sm:$0xff]
        %v468 = vld [vmem:[#allocation2 + $0x1a0] sm:$0xff]
        %v469 = vld [vmem:[#allocation2 + $0x1a8] sm:$0xff]
        %v470 = vld [vmem:[#allocation2 + $0x1b0] sm:$0xff]
        %v471 = vld [vmem:[#allocation2 + $0x1b8] sm:$0xff]
        %v472 = vld [vmem:[#allocation2 + $0x1c0] sm:$0xff]
        %v473 = vld [vmem:[#allocation2 + $0x1c8] sm:$0xff]
        %v474 = vld [vmem:[#allocation2 + $0x1d0] sm:$0xff]
        %v475 = vld [vmem:[#allocation2 + $0x1d8] sm:$0xff]
        %v476 = vld [vmem:[#allocation2 + $0x1e0] sm:$0xff]
        %v477 = vld [vmem:[#allocation2 + $0x1e8] sm:$0xff]
        %v478 = vld [vmem:[#allocation2 + $0x1f0] sm:$0xff]
        %v479 = vld [vmem:[#allocation2 + $0x1f8] sm:$0xff]
        %480 = vmatpush.msra.mxu0 %v476
        %481 = vmatpush.msra.mxu0 %v472
        %482 = vmatpush.msra.mxu0 %v468
        %483 = vmatpush.msra.mxu0 %v464
        %484 = vmatpush.msra.mxu0 %v460
        %485 = vmatpush.msra.mxu0 %v456
        %486 = vmatpush.msra.mxu0 %v452
        %487 = vmatpush.msra.mxu0 %v448
        %488 = vmatpush.msra.mxu0 %v444
        %489 = vmatpush.msra.mxu0 %v440
        %490 = vmatpush.msra.mxu0 %v436
        %491 = vmatpush.msra.mxu0 %v432
        %492 = vmatpush.msra.mxu0 %v428
        %493 = vmatpush.msra.mxu0 %v424
        %494 = vmatpush.msra.mxu0 %v420
        %495 = vmatpush.msra.mxu0 %v416
        %496 = vmatmul.f32.gmra.mxu0 %v407
        %v497 = vpop.f32.mrf.mxu0
        %v498 = vadd.f32 0.0, %v497
        %499 = vdwg.mxu0
        %500 = vmatpush.msra.mxu0 %v477
        %501 = vmatpush.msra.mxu0 %v473
        %502 = vmatpush.msra.mxu0 %v469
        %503 = vmatpush.msra.mxu0 %v465
        %504 = vmatpush.msra.mxu0 %v461
        %505 = vmatpush.msra.mxu0 %v457
        %506 = vmatpush.msra.mxu0 %v453
        %507 = vmatpush.msra.mxu0 %v449
        %508 = vmatpush.msra.mxu0 %v445
        %509 = vmatpush.msra.mxu0 %v441
        %510 = vmatpush.msra.mxu0 %v437
        %511 = vmatpush.msra.mxu0 %v433
        %512 = vmatpush.msra.mxu0 %v429
        %513 = vmatpush.msra.mxu0 %v425
        %514 = vmatpush.msra.mxu0 %v421
        %515 = vmatpush.msra.mxu0 %v417
        %516 = vmatmul.f32.gmra.mxu0 %v407
        %v517 = vpop.f32.mrf.mxu0
        %v518 = vadd.f32 0.0, %v517
        %519 = vdwg.mxu0
        %520 = vmatpush.msra.mxu0 %v478
        %521 = vmatpush.msra.mxu0 %v474
        %522 = vmatpush.msra.mxu0 %v470
        %523 = vmatpush.msra.mxu0 %v466
        %524 = vmatpush.msra.mxu0 %v462
        %525 = vmatpush.msra.mxu0 %v458
        %526 = vmatpush.msra.mxu0 %v454
        %527 = vmatpush.msra.mxu0 %v450
        %528 = vmatpush.msra.mxu0 %v446
        %529 = vmatpush.msra.mxu0 %v442
        %530 = vmatpush.msra.mxu0 %v438
        %531 = vmatpush.msra.mxu0 %v434
        %532 = vmatpush.msra.mxu0 %v430
        %533 = vmatpush.msra.mxu0 %v426
        %534 = vmatpush.msra.mxu0 %v422
        %535 = vmatpush.msra.mxu0 %v418
        %536 = vmatmul.f32.gmra.mxu0 %v407
        %v537 = vpop.f32.mrf.mxu0
        %v538 = vadd.f32 0.0, %v537
        %539 = vdwg.mxu0
        %540 = vmatpush.msra.mxu0 %v479
        %541 = vmatpush.msra.mxu0 %v475
        %542 = vmatpush.msra.mxu0 %v471
        %543 = vmatpush.msra.mxu0 %v467
        %544 = vmatpush.msra.mxu0 %v463
        %545 = vmatpush.msra.mxu0 %v459
        %546 = vmatpush.msra.mxu0 %v455
        %547 = vmatpush.msra.mxu0 %v451
        %548 = vmatpush.msra.mxu0 %v447
        %549 = vmatpush.msra.mxu0 %v443
        %550 = vmatpush.msra.mxu0 %v439
        %551 = vmatpush.msra.mxu0 %v435
        %552 = vmatpush.msra.mxu0 %v431
        %553 = vmatpush.msra.mxu0 %v427
        %554 = vmatpush.msra.mxu0 %v423
        %555 = vmatpush.msra.mxu0 %v419
        %556 = vmatmul.f32.gmra.mxu0 %v407
        %v557 = vpop.f32.mrf.mxu0
        %v558 = vadd.f32 0.0, %v557
        %559 = vdwg.mxu0
        %v560 = vadd.f32 %v412, %v498
        %v561 = vadd.f32 %v413, %v518
        %v562 = vadd.f32 %v414, %v538
        %v563 = vadd.f32 %v415, %v558
        %v564 = vmul.f32 %v560, 0.5
        %v565 = vtanh.pop %v564
        %v566 = vmul.f32 %v565, 0.5
        %v567 = vadd.f32 %v566, 0.5
        %v568 = vmul.f32 %v561, 0.5
        %v569 = vtanh.pop %v568
        %v570 = vmul.f32 %v569, 0.5
        %v571 = vadd.f32 %v570, 0.5
        %v572 = vtanh.pop %v562
        %v573 = vmul.f32 %v563, 0.5
        %v574 = vtanh.pop %v573
        %v575 = vmul.f32 %v574, 0.5
        %v576 = vadd.f32 %v575, 0.5
        %v577 = vmul.f32 %v571, %v408
        %v578 = vmul.f32 %v567, %v572
        %v579 = vadd.f32 %v577, %v578
        %v580 = vtanh.pop %v579
        %v581 = vmul.f32 %v576, %v580
        %s582 = sadd.s32 %s226, 1
        %v583 = vstv %s582
        %vm584 = vcmp.lt.s32.totalorder %v583, %v227
        %v585 = vsel %vm584, 1, 0
        %586 = vset.pattern.permute.xlu0 0
        %587 = vperm.xlu0 %586, %v585
        %v588 = vpop.permute.xlu0 %587
        %vm589 = vcmp.eq.s32.totalorder %v588, 1
        %v590 = vsel %vm589, %v581, %v407
        %v591 = vsel %vm589, %v579, %v408
        %v592 = vsel %vm589, %v581, 0.0
        %s593 = scalar_lea.vmem %s196, 8 [#allocation8]
        %594 = vst [vmem:[%s593] sm:$0xff] %v592
        %s595 = scalar_lea.vmem %s171, 64 [#allocation5]
        %v596 = vld [vmem:[%s595] sm:$0xff]
        %v597 = vld [vmem:[%s595 + $0x8] sm:$0xff]
        %v598 = vld [vmem:[%s595 + $0x10] sm:$0xff]
        %v599 = vld [vmem:[%s595 + $0x18] sm:$0xff]
        %v600 = vld [vmem:[#allocation2] sm:$0xff]
        %v601 = vld [vmem:[#allocation2 + $0x8] sm:$0xff]
        %v602 = vld [vmem:[#allocation2 + $0x10] sm:$0xff]
        %v603 = vld [vmem:[#allocation2 + $0x18] sm:$0xff]
        %v604 = vld [vmem:[#allocation2 + $0x20] sm:$0xff]
        %v605 = vld [vmem:[#allocation2 + $0x28] sm:$0xff]
        %v606 = vld [vmem:[#allocation2 + $0x30] sm:$0xff]
        %v607 = vld [vmem:[#allocation2 + $0x38] sm:$0xff]
        %v608 = vld [vmem:[#allocation2 + $0x40] sm:$0xff]
        %v609 = vld [vmem:[#allocation2 + $0x48] sm:$0xff]
        %v610 = vld [vmem:[#allocation2 + $0x50] sm:$0xff]
        %v611 = vld [vmem:[#allocation2 + $0x58] sm:$0xff]
        %v612 = vld [vmem:[#allocation2 + $0x60] sm:$0xff]
        %v613 = vld [vmem:[#allocation2 + $0x68] sm:$0xff]
        %v614 = vld [vmem:[#allocation2 + $0x70] sm:$0xff]
        %v615 = vld [vmem:[#allocation2 + $0x78] sm:$0xff]
        %v616 = vld [vmem:[#allocation2 + $0x80] sm:$0xff]
        %v617 = vld [vmem:[#allocation2 + $0x88] sm:$0xff]
        %v618 = vld [vmem:[#allocation2 + $0x90] sm:$0xff]
        %v619 = vld [vmem:[#allocation2 + $0x98] sm:$0xff]
        %v620 = vld [vmem:[#allocation2 + $0xa0] sm:$0xff]
        %v621 = vld [vmem:[#allocation2 + $0xa8] sm:$0xff]
        %v622 = vld [vmem:[#allocation2 + $0xb0] sm:$0xff]
        %v623 = vld [vmem:[#allocation2 + $0xb8] sm:$0xff]
        %v624 = vld [vmem:[#allocation2 + $0xc0] sm:$0xff]
        %v625 = vld [vmem:[#allocation2 + $0xc8] sm:$0xff]
        %v626 = vld [vmem:[#allocation2 + $0xd0] sm:$0xff]
        %v627 = vld [vmem:[#allocation2 + $0xd8] sm:$0xff]
        %v628 = vld [vmem:[#allocation2 + $0xe0] sm:$0xff]
        %v629 = vld [vmem:[#allocation2 + $0xe8] sm:$0xff]
        %v630 = vld [vmem:[#allocation2 + $0xf0] sm:$0xff]
        %v631 = vld [vmem:[#allocation2 + $0xf8] sm:$0xff]
        %v632 = vld [vmem:[#allocation2 + $0x100] sm:$0xff]
        %v633 = vld [vmem:[#allocation2 + $0x108] sm:$0xff]
        %v634 = vld [vmem:[#allocation2 + $0x110] sm:$0xff]
        %v635 = vld [vmem:[#allocation2 + $0x118] sm:$0xff]
        %v636 = vld [vmem:[#allocation2 + $0x120] sm:$0xff]
        %v637 = vld [vmem:[#allocation2 + $0x128] sm:$0xff]
        %v638 = vld [vmem:[#allocation2 + $0x130] sm:$0xff]
        %v639 = vld [vmem:[#allocation2 + $0x138] sm:$0xff]
        %v640 = vld [vmem:[#allocation2 + $0x140] sm:$0xff]
        %v641 = vld [vmem:[#allocation2 + $0x148] sm:$0xff]
        %v642 = vld [vmem:[#allocation2 + $0x150] sm:$0xff]
        %v643 = vld [vmem:[#allocation2 + $0x158] sm:$0xff]
        %v644 = vld [vmem:[#allocation2 + $0x160] sm:$0xff]
        %v645 = vld [vmem:[#allocation2 + $0x168] sm:$0xff]
        %v646 = vld [vmem:[#allocation2 + $0x170] sm:$0xff]
        %v647 = vld [vmem:[#allocation2 + $0x178] sm:$0xff]
        %v648 = vld [vmem:[#allocation2 + $0x180] sm:$0xff]
        %v649 = vld [vmem:[#allocation2 + $0x188] sm:$0xff]
        %v650 = vld [vmem:[#allocation2 + $0x190] sm:$0xff]
        %v651 = vld [vmem:[#allocation2 + $0x198] sm:$0xff]
        %v652 = vld [vmem:[#allocation2 + $0x1a0] sm:$0xff]
        %v653 = vld [vmem:[#allocation2 + $0x1a8] sm:$0xff]
        %v654 = vld [vmem:[#allocation2 + $0x1b0] sm:$0xff]
        %v655 = vld [vmem:[#allocation2 + $0x1b8] sm:$0xff]
        %v656 = vld [vmem:[#allocation2 + $0x1c0] sm:$0xff]
        %v657 = vld [vmem:[#allocation2 + $0x1c8] sm:$0xff]
        %v658 = vld [vmem:[#allocation2 + $0x1d0] sm:$0xff]
        %v659 = vld [vmem:[#allocation2 + $0x1d8] sm:$0xff]
        %v660 = vld [vmem:[#allocation2 + $0x1e0] sm:$0xff]
        %v661 = vld [vmem:[#allocation2 + $0x1e8] sm:$0xff]
        %v662 = vld [vmem:[#allocation2 + $0x1f0] sm:$0xff]
        %v663 = vld [vmem:[#allocation2 + $0x1f8] sm:$0xff]
        %664 = vmatpush.msra.mxu0 %v660
        %665 = vmatpush.msra.mxu0 %v656
        %666 = vmatpush.msra.mxu0 %v652
        %667 = vmatpush.msra.mxu0 %v648
        %668 = vmatpush.msra.mxu0 %v644
        %669 = vmatpush.msra.mxu0 %v640
        %670 = vmatpush.msra.mxu0 %v636
        %671 = vmatpush.msra.mxu0 %v632
        %672 = vmatpush.msra.mxu0 %v628
        %673 = vmatpush.msra.mxu0 %v624
        %674 = vmatpush.msra.mxu0 %v620
        %675 = vmatpush.msra.mxu0 %v616
        %676 = vmatpush.msra.mxu0 %v612
        %677 = vmatpush.msra.mxu0 %v608
        %678 = vmatpush.msra.mxu0 %v604
        %679 = vmatpush.msra.mxu0 %v600
        %680 = vmatmul.f32.gmra.mxu0 %v590
        %v681 = vpop.f32.mrf.mxu0
        %v682 = vadd.f32 0.0, %v681
        %683 = vdwg.mxu0
        %684 = vmatpush.msra.mxu0 %v661
        %685 = vmatpush.msra.mxu0 %v657
        %686 = vmatpush.msra.mxu0 %v653
        %687 = vmatpush.msra.mxu0 %v649
        %688 = vmatpush.msra.mxu0 %v645
        %689 = vmatpush.msra.mxu0 %v641
        %690 = vmatpush.msra.mxu0 %v637
        %691 = vmatpush.msra.mxu0 %v633
        %692 = vmatpush.msra.mxu0 %v629
        %693 = vmatpush.msra.mxu0 %v625
        %694 = vmatpush.msra.mxu0 %v621
        %695 = vmatpush.msra.mxu0 %v617
        %696 = vmatpush.msra.mxu0 %v613
        %697 = vmatpush.msra.mxu0 %v609
        %698 = vmatpush.msra.mxu0 %v605
        %699 = vmatpush.msra.mxu0 %v601
        %700 = vmatmul.f32.gmra.mxu0 %v590
        %v701 = vpop.f32.mrf.mxu0
        %v702 = vadd.f32 0.0, %v701
        %703 = vdwg.mxu0
        %704 = vmatpush.msra.mxu0 %v662
        %705 = vmatpush.msra.mxu0 %v658
        %706 = vmatpush.msra.mxu0 %v654
        %707 = vmatpush.msra.mxu0 %v650
        %708 = vmatpush.msra.mxu0 %v646
        %709 = vmatpush.msra.mxu0 %v642
        %710 = vmatpush.msra.mxu0 %v638
        %711 = vmatpush.msra.mxu0 %v634
        %712 = vmatpush.msra.mxu0 %v630
        %713 = vmatpush.msra.mxu0 %v626
        %714 = vmatpush.msra.mxu0 %v622
        %715 = vmatpush.msra.mxu0 %v618
        %716 = vmatpush.msra.mxu0 %v614
        %717 = vmatpush.msra.mxu0 %v610
        %718 = vmatpush.msra.mxu0 %v606
        %719 = vmatpush.msra.mxu0 %v602
        %720 = vmatmul.f32.gmra.mxu0 %v590
        %v721 = vpop.f32.mrf.mxu0
        %v722 = vadd.f32 0.0, %v721
        %723 = vdwg.mxu0
        %724 = vmatpush.msra.mxu0 %v663
        %725 = vmatpush.msra.mxu0 %v659
        %726 = vmatpush.msra.mxu0 %v655
        %727 = vmatpush.msra.mxu0 %v651
        %728 = vmatpush.msra.mxu0 %v647
        %729 = vmatpush.msra.mxu0 %v643
        %730 = vmatpush.msra.mxu0 %v639
        %731 = vmatpush.msra.mxu0 %v635
        %732 = vmatpush.msra.mxu0 %v631
        %733 = vmatpush.msra.mxu0 %v627
        %734 = vmatpush.msra.mxu0 %v623
        %735 = vmatpush.msra.mxu0 %v619
        %736 = vmatpush.msra.mxu0 %v615
        %737 = vmatpush.msra.mxu0 %v611
        %738 = vmatpush.msra.mxu0 %v607
        %739 = vmatpush.msra.mxu0 %v603
        %740 = vmatmul.f32.gmra.mxu0 %v590
        %v741 = vpop.f32.mrf.mxu0
        %v742 = vadd.f32 0.0, %v741
        %743 = vdwg.mxu0
        %v744 = vadd.f32 %v596, %v682
        %v745 = vadd.f32 %v597, %v702
        %v746 = vadd.f32 %v598, %v722
        %v747 = vadd.f32 %v599, %v742
        %v748 = vmul.f32 %v744, 0.5
        %v749 = vtanh.pop %v748
        %v750 = vmul.f32 %v749, 0.5
        %v751 = vadd.f32 %v750, 0.5
        %v752 = vmul.f32 %v745, 0.5
        %v753 = vtanh.pop %v752
        %v754 = vmul.f32 %v753, 0.5
        %v755 = vadd.f32 %v754, 0.5
        %v756 = vtanh.pop %v746
        %v757 = vmul.f32 %v747, 0.5
        %v758 = vtanh.pop %v757
        %v759 = vmul.f32 %v758, 0.5
        %v760 = vadd.f32 %v759, 0.5
        %v761 = vmul.f32 %v755, %v591
        %v762 = vmul.f32 %v751, %v756
        %v763 = vadd.f32 %v761, %v762
        %v764 = vtanh.pop %v763
        %v765 = vmul.f32 %v760, %v764
        %s766 = sadd.s32 %s226, 2
        %v767 = vstv %s766
        %vm768 = vcmp.lt.s32.totalorder %v767, %v227
        %v769 = vsel %vm768, 1, 0
        %770 = vset.pattern.permute.xlu0 0
        %771 = vperm.xlu0 %770, %v769
        %v772 = vpop.permute.xlu0 %771
        %vm773 = vcmp.eq.s32.totalorder %v772, 1
        %v774 = vsel %vm773, %v765, %v590
        %v775 = vsel %vm773, %v763, %v591
        %v776 = vsel %vm773, %v765, 0.0
        %s777 = scalar_lea.vmem %s196, 16 [#allocation8]
        %778 = vst [vmem:[%s777] sm:$0xff] %v776
        %s779 = scalar_lea.vmem %s171, 96 [#allocation5]
        %v780 = vld [vmem:[%s779] sm:$0xff]
        %v781 = vld [vmem:[%s779 + $0x8] sm:$0xff]
        %v782 = vld [vmem:[%s779 + $0x10] sm:$0xff]
        %v783 = vld [vmem:[%s779 + $0x18] sm:$0xff]
        %v784 = vld [vmem:[#allocation2] sm:$0xff]
        %v785 = vld [vmem:[#allocation2 + $0x8] sm:$0xff]
        %v786 = vld [vmem:[#allocation2 + $0x10] sm:$0xff]
        %v787 = vld [vmem:[#allocation2 + $0x18] sm:$0xff]
        %v788 = vld [vmem:[#allocation2 + $0x20] sm:$0xff]
        %v789 = vld [vmem:[#allocation2 + $0x28] sm:$0xff]
        %v790 = vld [vmem:[#allocation2 + $0x30] sm:$0xff]
        %v791 = vld [vmem:[#allocation2 + $0x38] sm:$0xff]
        %v792 = vld [vmem:[#allocation2 + $0x40] sm:$0xff]
        %v793 = vld [vmem:[#allocation2 + $0x48] sm:$0xff]
        %v794 = vld [vmem:[#allocation2 + $0x50] sm:$0xff]
        %v795 = vld [vmem:[#allocation2 + $0x58] sm:$0xff]
        %v796 = vld [vmem:[#allocation2 + $0x60] sm:$0xff]
        %v797 = vld [vmem:[#allocation2 + $0x68] sm:$0xff]
        %v798 = vld [vmem:[#allocation2 + $0x70] sm:$0xff]
        %v799 = vld [vmem:[#allocation2 + $0x78] sm:$0xff]
        %v800 = vld [vmem:[#allocation2 + $0x80] sm:$0xff]
        %v801 = vld [vmem:[#allocation2 + $0x88] sm:$0xff]
        %v802 = vld [vmem:[#allocation2 + $0x90] sm:$0xff]
        %v803 = vld [vmem:[#allocation2 + $0x98] sm:$0xff]
        %v804 = vld [vmem:[#allocation2 + $0xa0] sm:$0xff]
        %v805 = vld [vmem:[#allocation2 + $0xa8] sm:$0xff]
        %v806 = vld [vmem:[#allocation2 + $0xb0] sm:$0xff]
        %v807 = vld [vmem:[#allocation2 + $0xb8] sm:$0xff]
        %v808 = vld [vmem:[#allocation2 + $0xc0] sm:$0xff]
        %v809 = vld [vmem:[#allocation2 + $0xc8] sm:$0xff]
        %v810 = vld [vmem:[#allocation2 + $0xd0] sm:$0xff]
        %v811 = vld [vmem:[#allocation2 + $0xd8] sm:$0xff]
        %v812 = vld [vmem:[#allocation2 + $0xe0] sm:$0xff]
        %v813 = vld [vmem:[#allocation2 + $0xe8] sm:$0xff]
        %v814 = vld [vmem:[#allocation2 + $0xf0] sm:$0xff]
        %v815 = vld [vmem:[#allocation2 + $0xf8] sm:$0xff]
        %v816 = vld [vmem:[#allocation2 + $0x100] sm:$0xff]
        %v817 = vld [vmem:[#allocation2 + $0x108] sm:$0xff]
        %v818 = vld [vmem:[#allocation2 + $0x110] sm:$0xff]
        %v819 = vld [vmem:[#allocation2 + $0x118] sm:$0xff]
        %v820 = vld [vmem:[#allocation2 + $0x120] sm:$0xff]
        %v821 = vld [vmem:[#allocation2 + $0x128] sm:$0xff]
        %v822 = vld [vmem:[#allocation2 + $0x130] sm:$0xff]
        %v823 = vld [vmem:[#allocation2 + $0x138] sm:$0xff]
        %v824 = vld [vmem:[#allocation2 + $0x140] sm:$0xff]
        %v825 = vld [vmem:[#allocation2 + $0x148] sm:$0xff]
        %v826 = vld [vmem:[#allocation2 + $0x150] sm:$0xff]
        %v827 = vld [vmem:[#allocation2 + $0x158] sm:$0xff]
        %v828 = vld [vmem:[#allocation2 + $0x160] sm:$0xff]
        %v829 = vld [vmem:[#allocation2 + $0x168] sm:$0xff]
        %v830 = vld [vmem:[#allocation2 + $0x170] sm:$0xff]
        %v831 = vld [vmem:[#allocation2 + $0x178] sm:$0xff]
        %v832 = vld [vmem:[#allocation2 + $0x180] sm:$0xff]
        %v833 = vld [vmem:[#allocation2 + $0x188] sm:$0xff]
        %v834 = vld [vmem:[#allocation2 + $0x190] sm:$0xff]
        %v835 = vld [vmem:[#allocation2 + $0x198] sm:$0xff]
        %v836 = vld [vmem:[#allocation2 + $0x1a0] sm:$0xff]
        %v837 = vld [vmem:[#allocation2 + $0x1a8] sm:$0xff]
        %v838 = vld [vmem:[#allocation2 + $0x1b0] sm:$0xff]
        %v839 = vld [vmem:[#allocation2 + $0x1b8] sm:$0xff]
        %v840 = vld [vmem:[#allocation2 + $0x1c0] sm:$0xff]
        %v841 = vld [vmem:[#allocation2 + $0x1c8] sm:$0xff]
        %v842 = vld [vmem:[#allocation2 + $0x1d0] sm:$0xff]
        %v843 = vld [vmem:[#allocation2 + $0x1d8] sm:$0xff]
        %v844 = vld [vmem:[#allocation2 + $0x1e0] sm:$0xff]
        %v845 = vld [vmem:[#allocation2 + $0x1e8] sm:$0xff]
        %v846 = vld [vmem:[#allocation2 + $0x1f0] sm:$0xff]
        %v847 = vld [vmem:[#allocation2 + $0x1f8] sm:$0xff]
        %848 = vmatpush.msra.mxu0 %v844
        %849 = vmatpush.msra.mxu0 %v840
        %850 = vmatpush.msra.mxu0 %v836
        %851 = vmatpush.msra.mxu0 %v832
        %852 = vmatpush.msra.mxu0 %v828
        %853 = vmatpush.msra.mxu0 %v824
        %854 = vmatpush.msra.mxu0 %v820
        %855 = vmatpush.msra.mxu0 %v816
        %856 = vmatpush.msra.mxu0 %v812
        %857 = vmatpush.msra.mxu0 %v808
        %858 = vmatpush.msra.mxu0 %v804
        %859 = vmatpush.msra.mxu0 %v800
        %860 = vmatpush.msra.mxu0 %v796
        %861 = vmatpush.msra.mxu0 %v792
        %862 = vmatpush.msra.mxu0 %v788
        %863 = vmatpush.msra.mxu0 %v784
        %864 = vmatmul.f32.gmra.mxu0 %v774
        %v865 = vpop.f32.mrf.mxu0
        %v866 = vadd.f32 0.0, %v865
        %867 = vdwg.mxu0
        %868 = vmatpush.msra.mxu0 %v845
        %869 = vmatpush.msra.mxu0 %v841
        %870 = vmatpush.msra.mxu0 %v837
        %871 = vmatpush.msra.mxu0 %v833
        %872 = vmatpush.msra.mxu0 %v829
        %873 = vmatpush.msra.mxu0 %v825
        %874 = vmatpush.msra.mxu0 %v821
        %875 = vmatpush.msra.mxu0 %v817
        %876 = vmatpush.msra.mxu0 %v813
        %877 = vmatpush.msra.mxu0 %v809
        %878 = vmatpush.msra.mxu0 %v805
        %879 = vmatpush.msra.mxu0 %v801
        %880 = vmatpush.msra.mxu0 %v797
        %881 = vmatpush.msra.mxu0 %v793
        %882 = vmatpush.msra.mxu0 %v789
        %883 = vmatpush.msra.mxu0 %v785
        %884 = vmatmul.f32.gmra.mxu0 %v774
        %v885 = vpop.f32.mrf.mxu0
        %v886 = vadd.f32 0.0, %v885
        %887 = vdwg.mxu0
        %888 = vmatpush.msra.mxu0 %v846
        %889 = vmatpush.msra.mxu0 %v842
        %890 = vmatpush.msra.mxu0 %v838
        %891 = vmatpush.msra.mxu0 %v834
        %892 = vmatpush.msra.mxu0 %v830
        %893 = vmatpush.msra.mxu0 %v826
        %894 = vmatpush.msra.mxu0 %v822
        %895 = vmatpush.msra.mxu0 %v818
        %896 = vmatpush.msra.mxu0 %v814
        %897 = vmatpush.msra.mxu0 %v810
        %898 = vmatpush.msra.mxu0 %v806
        %899 = vmatpush.msra.mxu0 %v802
        %900 = vmatpush.msra.mxu0 %v798
        %901 = vmatpush.msra.mxu0 %v794
        %902 = vmatpush.msra.mxu0 %v790
        %903 = vmatpush.msra.mxu0 %v786
        %904 = vmatmul.f32.gmra.mxu0 %v774
        %v905 = vpop.f32.mrf.mxu0
        %v906 = vadd.f32 0.0, %v905
        %907 = vdwg.mxu0
        %908 = vmatpush.msra.mxu0 %v847
        %909 = vmatpush.msra.mxu0 %v843
        %910 = vmatpush.msra.mxu0 %v839
        %911 = vmatpush.msra.mxu0 %v835
        %912 = vmatpush.msra.mxu0 %v831
        %913 = vmatpush.msra.mxu0 %v827
        %914 = vmatpush.msra.mxu0 %v823
        %915 = vmatpush.msra.mxu0 %v819
        %916 = vmatpush.msra.mxu0 %v815
        %917 = vmatpush.msra.mxu0 %v811
        %918 = vmatpush.msra.mxu0 %v807
        %919 = vmatpush.msra.mxu0 %v803
        %920 = vmatpush.msra.mxu0 %v799
        %921 = vmatpush.msra.mxu0 %v795
        %922 = vmatpush.msra.mxu0 %v791
        %923 = vmatpush.msra.mxu0 %v787
        %924 = vmatmul.f32.gmra.mxu0 %v774
        %v925 = vpop.f32.mrf.mxu0
        %v926 = vadd.f32 0.0, %v925
        %927 = vdwg.mxu0
        %v928 = vadd.f32 %v780, %v866
        %v929 = vadd.f32 %v781, %v886
        %v930 = vadd.f32 %v782, %v906
        %v931 = vadd.f32 %v783, %v926
        %v932 = vmul.f32 %v928, 0.5
        %v933 = vtanh.pop %v932
        %v934 = vmul.f32 %v933, 0.5
        %v935 = vadd.f32 %v934, 0.5
        %v936 = vmul.f32 %v929, 0.5
        %v937 = vtanh.pop %v936
        %v938 = vmul.f32 %v937, 0.5
        %v939 = vadd.f32 %v938, 0.5
        %v940 = vtanh.pop %v930
        %v941 = vmul.f32 %v931, 0.5
        %v942 = vtanh.pop %v941
        %v943 = vmul.f32 %v942, 0.5
        %v944 = vadd.f32 %v943, 0.5
        %v945 = vmul.f32 %v939, %v775
        %v946 = vmul.f32 %v935, %v940
        %v947 = vadd.f32 %v945, %v946
        %v948 = vtanh.pop %v947
        %v949 = vmul.f32 %v944, %v948
        %s950 = sadd.s32 %s226, 3
        %v951 = vstv %s950
        %vm952 = vcmp.lt.s32.totalorder %v951, %v227
        %v953 = vsel %vm952, 1, 0
        %954 = vset.pattern.permute.xlu0 0
        %955 = vperm.xlu0 %954, %v953
        %v956 = vpop.permute.xlu0 %955
        %vm957 = vcmp.eq.s32.totalorder %v956, 1
        %v958 = vsel %vm957, %v949, %v774
        %v959 = vsel %vm957, %v947, %v775
        %v960 = vsel %vm957, %v949, 0.0
        %s961 = scalar_lea.vmem %s196, 24 [#allocation8]
        %962 = vst [vmem:[%s961] sm:$0xff] %v960
        %963 = vst [vmem:[#allocation3] sm:$0xff] %v958
        %964 = vst [vmem:[#allocation4] sm:$0xff] %v959
        %s965 = sand.u32 %s96, 1
        %s966 = scalar_lea.sflag [#allocation7], %s965
        %s967 = sand.u32 %s96, 1
        %s968 = smul.addr %s967, 32
        %s969 = scalar_lea.vmem [#allocation8], %s968
        // Predicated region
        $region42: #{tpu_custom_call.1} parent=27 // pred_check
          %p970 = pneg %p106
        $region43: #{tpu_custom_call.1} parent=27 // pred_check_branch
          %972 = sbr.rel (%p970) target = $region45
        $region44: #{tpu_custom_call.1} parent=27 // pred_region
          %s973 = smul.u32 4, %s25
          %975 = vsyncadd %s966, 0
          %s976 = smul.addr %s973, 2
          %s977 = sadd.s32 %s24, %s976
          %s978 = smul.addr %s977, 8
          %s979 = scalar_lea.hbm %s3, %s978
          %s980 = sshll.u32 %s969, 4
          %s981 = int_to_ptr.vmem [resolvable:$true] %s980
          %s982 = sshll.u32 %s979, 4
          %s983 = int_to_ptr.hbm [resolvable:$true] %s982
          %988 = dma.vmem_to_hbm [thread:$0]  %s981, 512, %s983, %s966, 128, 256, 8
        $region45: #{tpu_custom_call.1} parent=27 // pred_fallthru
          _
      $region28: #{tpu_custom_call.1} parent=5 // pred_fallthru
        _
      %p989 = scmp.le.s32.totalorder 2, %s15
      // Predicated region
      $region46: #{tpu_custom_call.1} parent=5 // pred_check
        %p990 = pneg %p989
      $region47: #{tpu_custom_call.1} parent=5 // pred_check_branch
        %992 = sbr.rel (%p990) target = $region49
      $region48: #{tpu_custom_call.1} parent=5 // pred_region
        %s993 = ssub.s32 %s15, 2
        // Predicated region
        $region50: #{tpu_custom_call.1} parent=48 // pred_check
          %p994 = pneg %p112
        $region51: #{tpu_custom_call.1} parent=48 // pred_check_branch
          %996 = sbr.rel (%p994) target = $region53
        $region52: #{tpu_custom_call.1} parent=48 // pred_region
          %s997 = sand.u32 %s97, 1
          %s998 = scalar_lea.sflag [#allocation7], %s997
          %s999 = sand.u32 %s97, 1
          %s1000 = smul.addr %s999, 32
          %s1001 = scalar_lea.vmem [#allocation8], %s1000
          %1003 = dma.done %s998, 512
        $region53: #{tpu_custom_call.1} parent=48 // pred_fallthru
          _
      $region49: #{tpu_custom_call.1} parent=5 // pred_fallthru
        _
    $region6: #{tpu_custom_call.1} parent=1 // loop_footer
      %s19 = sadd.s32 1, %s15
    $region7: #{tpu_custom_call.1} parent=1 // loop_footer_branch
      %14 = sbr.rel target = $region3
    $region8: #{tpu_custom_call.1} parent=1 // loop_exit
      _
    %1004 = vsyncpa [#allocation6], 1
    %s1005 = scalar_lea.sflag [#allocation6], 1
    %1006 = vsyncpa %s1005, 1
    %1007 = vsyncpa [#allocation7], 1
    %s1008 = scalar_lea.sflag [#allocation7], 1
    %1009 = vsyncpa %s1008, 1

</llo_original>
